<compile_context>
chip_gen: v7x
topology: tpu7x:2x2x1
jax: 0.10.0
libtpu: 0.0.40
codegen_flags: <defaults>
</compile_context>

<pallas_src>
import functools

import jax
import jax.numpy as jnp
from jax.experimental import pallas as pl
from jax.experimental.pallas import tpu as pltpu


_LANE = 128  # vreg lane width; tiny inner dims are zero-padded up to this


def _autoencoder_kernel(
    x_ref,
    w1_ref, b1_ref,
    w2_ref, b2_ref,
    w3_ref, b3_ref,
    w4_ref, b4_ref,
    w5_ref, b5_ref,
    w6_ref, b6_ref,
    o_ref,
):
    # x arrives as f32 (halves HBM traffic vs. wrapper-side cast); cast to the
    # MXU-native bf16 here (VPU cast hides under the matmul / DMA).
    # Weights are bf16, biases are f32 (1, F) rows. Every dot accumulates in
    # f32; ReLU / bias-add epilogues stay f32.
    x = x_ref[...].astype(jnp.bfloat16)

    # ---- encoder ----
    # Linear(F_in, F_in//16) -> Dropout(identity, eval) -> ReLU
    h = jnp.dot(x, w1_ref[...], preferred_element_type=jnp.float32) + b1_ref[...]
    h = jnp.maximum(h, 0.0)
    # Linear(hid, hid) -> ReLU
    h = jnp.dot(h.astype(jnp.bfloat16), w2_ref[...],
                preferred_element_type=jnp.float32) + b2_ref[...]
    h = jnp.maximum(h, 0.0)
    # Linear(hid, latent) -> ReLU
    z = jnp.dot(h.astype(jnp.bfloat16), w3_ref[...],
                preferred_element_type=jnp.float32) + b3_ref[...]
    z = jnp.maximum(z, 0.0)

    # ---- decoder ----
    # Linear(latent, hid) -> Dropout(identity, eval) -> ReLU
    h = jnp.dot(z.astype(jnp.bfloat16), w4_ref[...],
                preferred_element_type=jnp.float32) + b4_ref[...]
    h = jnp.maximum(h, 0.0)
    # Linear(hid, hid) -> ReLU
    h = jnp.dot(h.astype(jnp.bfloat16), w5_ref[...],
                preferred_element_type=jnp.float32) + b5_ref[...]
    h = jnp.maximum(h, 0.0)
    # Linear(hid, F_out)   (no activation; result is already f32)
    o_ref[...] = jnp.dot(h.astype(jnp.bfloat16), w6_ref[...],
                         preferred_element_type=jnp.float32) + b6_ref[...]


def _round_up(n, m):
    return ((n + m - 1) // m) * m


def _prepare_params(params):
    """Zero-pad hidden/latent dims to lane multiples (exact same math), cast
    weights to bf16 matmul operands, reshape biases to (1, F) f32 rows."""
    w1, b1, w2, b2, w3, b3, w4, b4, w5, b5, w6, b6 = params
    f_in, hid = w1.shape
    lat = w3.shape[1]
    f_out = w6.shape[1]
    hid_p = _round_up(hid, _LANE)
    lat_p = _round_up(lat, _LANE)

    def wpad(w, rows, cols):
        return jnp.pad(
            w, ((0, rows - w.shape[0]), (0, cols - w.shape[1]))
        ).astype(jnp.bfloat16)

    def bpad(b, cols):
        return jnp.pad(b, (0, cols - b.shape[0])).reshape(1, cols).astype(jnp.float32)

    return (
        wpad(w1, f_in, hid_p),  bpad(b1, hid_p),
        wpad(w2, hid_p, hid_p), bpad(b2, hid_p),
        wpad(w3, hid_p, lat_p), bpad(b3, lat_p),
        wpad(w4, lat_p, hid_p), bpad(b4, hid_p),
        wpad(w5, hid_p, hid_p), bpad(b5, hid_p),
        wpad(w6, hid_p, f_out), bpad(b6, f_out),
    )


@functools.partial(jax.jit, static_argnames=("block_b",))
def autoencoder_forward(x, params, *, block_b=256):
    """x: (B, input_feature) f32; params: flat tuple of (W, b) with W as (in, out) f32."""
    B, f_in = x.shape
    f_out = params[-1].shape[0]

    pparams = _prepare_params(params)

    # Batch tile: fill the MXU M dimension (256 on v6e/v7x, multiple of 128 on
    # v5e), but never larger than the (8-aligned) batch itself.
    tb = min(block_b, _round_up(max(B, 8), 8))
    bp = _round_up(B, tb)
    # Only materialize a pad when the batch isn't already tile-aligned.
    xp = x if bp == B else jnp.pad(x, ((0, bp - B), (0, 0)))

    grid = (bp // tb,)

    def resident(shape):
        # Constant block index => the tile is DMA'd once and stays VMEM-resident
        # across all batch-grid steps (no re-copy when the index doesn't change).
        return pl.BlockSpec(shape, lambda i: (0, 0))

    in_specs = [pl.BlockSpec((tb, f_in), lambda i: (i, 0))] + [
        resident(p.shape) for p in pparams
    ]
    out_specs = pl.BlockSpec((tb, f_out), lambda i: (i, 0))

    # Explicit VMEM budget: double-buffered f32 x / f32 out tiles +
    # weights/biases (double-buffer worst case) + headroom for inter-layer
    # activations.
    weight_bytes = sum(2 * p.size * p.dtype.itemsize for p in pparams)
    tile_bytes = 2 * tb * f_in * 4 + 2 * tb * f_out * 4
    act_bytes = 4 * tb * max(p.shape[-1] for p in pparams) * 4
    vmem_limit = max(32 * 1024 * 1024,
                     int(1.5 * (weight_bytes + tile_bytes + act_bytes)))

    out = pl.pallas_call(
        _autoencoder_kernel,
        out_shape=jax.ShapeDtypeStruct((bp, f_out), jnp.float32),
        grid=grid,
        in_specs=in_specs,
        out_specs=out_specs,
        compiler_params=pltpu.CompilerParams(
            dimension_semantics=("parallel",),   # shard batch across v7x's 2 TCs
            vmem_limit_bytes=vmem_limit,
        ),
    )(xp, *pparams)
    return out if bp == B else out[:B]


def init_params(key, input_feature, latent_dim, output_feature):
    """PyTorch-style init U(-1/sqrt(fan_in), 1/sqrt(fan_in)); W stored as (in, out)."""
    hid = input_feature // 16
    layer_dims = [
        (input_feature, hid),   # encoder L1
        (hid, hid),             # encoder L2
        (hid, latent_dim),      # encoder L3
        (latent_dim, hid),      # decoder L1
        (hid, hid),             # decoder L2
        (hid, output_feature),  # decoder L3
    ]
    params = []
    for (fan_in, fan_out) in layer_dims:
        key, kw, kb = jax.random.split(key, 3)
        bound = 1.0 / jnp.sqrt(jnp.float32(fan_in))
        w = jax.random.uniform(kw, (fan_in, fan_out), jnp.float32, -bound, bound)
        b = jax.random.uniform(kb, (fan_out,), jnp.float32, -bound, bound)
        params.append(w)
        params.append(b)
    return tuple(params)


def reference_forward(x, params):
    """Pure-JAX f32 reference (eval-mode dropout == identity)."""
    w1, b1, w2, b2, w3, b3, w4, b4, w5, b5, w6, b6 = params
    h = jnp.maximum(x @ w1 + b1, 0.0)
    h = jnp.maximum(h @ w2 + b2, 0.0)
    z = jnp.maximum(h @ w3 + b3, 0.0)
    h = jnp.maximum(z @ w4 + b4, 0.0)
    h = jnp.maximum(h @ w5 + b5, 0.0)
    return (h @ w6 + b6).astype(jnp.float32)


if __name__ == "__main__":
    # Shapes consistent with the module:
    #   input_feature = 256 -> hidden = 16, latent_dim = 50, output_feature = 256
    # Batch 512 so the pipelined batch grid (TB=256) has >1 step.
    B = 512
    input_feature = 256
    latent_dim = 50
    output_feature = 256

    key = jax.random.PRNGKey(0)
    key, kx = jax.random.split(key)
    x = jax.random.normal(kx, (B, input_feature), jnp.float32)

    params = init_params(key, input_feature, latent_dim, output_feature)

    out = autoencoder_forward(x, params)
    out = jax.block_until_ready(out)

    ref = reference_forward(x, params)
    assert out.shape == (B, output_feature)
    assert out.dtype == jnp.float32
    # bf16 matmul operands with f32 accumulation: compare with a relative bound.
    rel_err = float(jnp.max(jnp.abs(out - ref)) / (jnp.max(jnp.abs(ref)) + 1e-6))
    assert rel_err < 2e-2, f"relative error too large: {rel_err}"

    print("KERNEL_OK")
</pallas_src>

<mosaic_0001>
module attributes {stable_mosaic.version = 11 : i64} {
  func.func @_autoencoder_kernel(%arg0: i32, %arg1: memref<256x256xf32, #tpu.memory_space<vmem>>, %arg2: memref<256x128xbf16, #tpu.memory_space<vmem>>, %arg3: memref<1x128xf32, #tpu.memory_space<vmem>>, %arg4: memref<128x128xbf16, #tpu.memory_space<vmem>>, %arg5: memref<1x128xf32, #tpu.memory_space<vmem>>, %arg6: memref<128x128xbf16, #tpu.memory_space<vmem>>, %arg7: memref<1x128xf32, #tpu.memory_space<vmem>>, %arg8: memref<128x128xbf16, #tpu.memory_space<vmem>>, %arg9: memref<1x128xf32, #tpu.memory_space<vmem>>, %arg10: memref<128x128xbf16, #tpu.memory_space<vmem>>, %arg11: memref<1x128xf32, #tpu.memory_space<vmem>>, %arg12: memref<128x256xbf16, #tpu.memory_space<vmem>>, %arg13: memref<1x256xf32, #tpu.memory_space<vmem>>, %arg14: memref<256x256xf32, #tpu.memory_space<vmem>>) attributes {dimension_semantics = [#tpu.dimension_semantics<parallel>], iteration_bounds = array<i64: 2>, scalar_prefetch = 0 : i64, scratch_operands = 0 : i64, tpu.core_type = #tpu.core_type<tc>, window_params = [{transform_indices = @transform_0, window_bounds = array<i64: 256, 256>}, {pipeline_mode = #tpu.pipeline_mode<synchronous>, transform_indices = @transform_1, window_bounds = array<i64: 256, 128>}, {pipeline_mode = #tpu.pipeline_mode<synchronous>, transform_indices = @transform_2, window_bounds = array<i64: 1, 128>}, {pipeline_mode = #tpu.pipeline_mode<synchronous>, transform_indices = @transform_3, window_bounds = array<i64: 128, 128>}, {pipeline_mode = #tpu.pipeline_mode<synchronous>, transform_indices = @transform_4, window_bounds = array<i64: 1, 128>}, {pipeline_mode = #tpu.pipeline_mode<synchronous>, transform_indices = @transform_5, window_bounds = array<i64: 128, 128>}, {pipeline_mode = #tpu.pipeline_mode<synchronous>, transform_indices = @transform_6, window_bounds = array<i64: 1, 128>}, {pipeline_mode = #tpu.pipeline_mode<synchronous>, transform_indices = @transform_7, window_bounds = array<i64: 128, 128>}, {pipeline_mode = #tpu.pipeline_mode<synchronous>, transform_indices = @transform_8, window_bounds = array<i64: 1, 128>}, {pipeline_mode = #tpu.pipeline_mode<synchronous>, transform_indices = @transform_9, window_bounds = array<i64: 128, 128>}, {pipeline_mode = #tpu.pipeline_mode<synchronous>, transform_indices = @transform_10, window_bounds = array<i64: 1, 128>}, {pipeline_mode = #tpu.pipeline_mode<synchronous>, transform_indices = @transform_11, window_bounds = array<i64: 128, 256>}, {pipeline_mode = #tpu.pipeline_mode<synchronous>, transform_indices = @transform_12, window_bounds = array<i64: 1, 256>}, {transform_indices = @transform_13, window_bounds = array<i64: 256, 256>}]} {
    %c0 = arith.constant 0 : index
    %c0_0 = arith.constant 0 : index
    %0 = vector.load %arg1[%c0, %c0_0] : memref<256x256xf32, #tpu.memory_space<vmem>>, vector<256x256xf32>
    %1 = arith.truncf %0 : vector<256x256xf32> to vector<256x256xbf16>
    %c0_1 = arith.constant 0 : index
    %c0_2 = arith.constant 0 : index
    %2 = vector.load %arg2[%c0_1, %c0_2] : memref<256x128xbf16, #tpu.memory_space<vmem>>, vector<256x128xbf16>
    %cst = arith.constant dense<0.000000e+00> : vector<256x128xf32>
    %3 = tpu.matmul %1, %2, %cst {dimension_numbers = #tpu.dot_dimension_numbers<[1], [0], [0], [1], [0, 0, 1, 1], [], []>} : vector<256x256xbf16>, vector<256x128xbf16>, vector<256x128xf32> -> vector<256x128xf32>
    %c0_3 = arith.constant 0 : index
    %c0_4 = arith.constant 0 : index
    %4 = vector.load %arg3[%c0_3, %c0_4] : memref<1x128xf32, #tpu.memory_space<vmem>>, vector<1x128xf32>
    %5 = vector.broadcast %4 : vector<1x128xf32> to vector<256x128xf32>
    %6 = arith.addf %3, %5 : vector<256x128xf32>
    %cst_5 = arith.constant 0.000000e+00 : f32
    %7 = vector.broadcast %cst_5 : f32 to vector<256x128xf32>
    %8 = arith.maximumf %6, %7 : vector<256x128xf32>
    %9 = arith.truncf %8 : vector<256x128xf32> to vector<256x128xbf16>
    %c0_6 = arith.constant 0 : index
    %c0_7 = arith.constant 0 : index
    %10 = vector.load %arg4[%c0_6, %c0_7] : memref<128x128xbf16, #tpu.memory_space<vmem>>, vector<128x128xbf16>
    %cst_8 = arith.constant dense<0.000000e+00> : vector<256x128xf32>
    %11 = tpu.matmul %9, %10, %cst_8 {dimension_numbers = #tpu.dot_dimension_numbers<[1], [0], [0], [1], [0, 0, 1, 1], [], []>} : vector<256x128xbf16>, vector<128x128xbf16>, vector<256x128xf32> -> vector<256x128xf32>
    %c0_9 = arith.constant 0 : index
    %c0_10 = arith.constant 0 : index
    %12 = vector.load %arg5[%c0_9, %c0_10] : memref<1x128xf32, #tpu.memory_space<vmem>>, vector<1x128xf32>
    %13 = vector.broadcast %12 : vector<1x128xf32> to vector<256x128xf32>
    %14 = arith.addf %11, %13 : vector<256x128xf32>
    %cst_11 = arith.constant 0.000000e+00 : f32
    %15 = vector.broadcast %cst_11 : f32 to vector<256x128xf32>
    %16 = arith.maximumf %14, %15 : vector<256x128xf32>
    %17 = arith.truncf %16 : vector<256x128xf32> to vector<256x128xbf16>
    %c0_12 = arith.constant 0 : index
    %c0_13 = arith.constant 0 : index
    %18 = vector.load %arg6[%c0_12, %c0_13] : memref<128x128xbf16, #tpu.memory_space<vmem>>, vector<128x128xbf16>
    %cst_14 = arith.constant dense<0.000000e+00> : vector<256x128xf32>
    %19 = tpu.matmul %17, %18, %cst_14 {dimension_numbers = #tpu.dot_dimension_numbers<[1], [0], [0], [1], [0, 0, 1, 1], [], []>} : vector<256x128xbf16>, vector<128x128xbf16>, vector<256x128xf32> -> vector<256x128xf32>
    %c0_15 = arith.constant 0 : index
    %c0_16 = arith.constant 0 : index
    %20 = vector.load %arg7[%c0_15, %c0_16] : memref<1x128xf32, #tpu.memory_space<vmem>>, vector<1x128xf32>
    %21 = vector.broadcast %20 : vector<1x128xf32> to vector<256x128xf32>
    %22 = arith.addf %19, %21 : vector<256x128xf32>
    %cst_17 = arith.constant 0.000000e+00 : f32
    %23 = vector.broadcast %cst_17 : f32 to vector<256x128xf32>
    %24 = arith.maximumf %22, %23 : vector<256x128xf32>
    %25 = arith.truncf %24 : vector<256x128xf32> to vector<256x128xbf16>
    %c0_18 = arith.constant 0 : index
    %c0_19 = arith.constant 0 : index
    %26 = vector.load %arg8[%c0_18, %c0_19] : memref<128x128xbf16, #tpu.memory_space<vmem>>, vector<128x128xbf16>
    %cst_20 = arith.constant dense<0.000000e+00> : vector<256x128xf32>
    %27 = tpu.matmul %25, %26, %cst_20 {dimension_numbers = #tpu.dot_dimension_numbers<[1], [0], [0], [1], [0, 0, 1, 1], [], []>} : vector<256x128xbf16>, vector<128x128xbf16>, vector<256x128xf32> -> vector<256x128xf32>
    %c0_21 = arith.constant 0 : index
    %c0_22 = arith.constant 0 : index
    %28 = vector.load %arg9[%c0_21, %c0_22] : memref<1x128xf32, #tpu.memory_space<vmem>>, vector<1x128xf32>
    %29 = vector.broadcast %28 : vector<1x128xf32> to vector<256x128xf32>
    %30 = arith.addf %27, %29 : vector<256x128xf32>
    %cst_23 = arith.constant 0.000000e+00 : f32
    %31 = vector.broadcast %cst_23 : f32 to vector<256x128xf32>
    %32 = arith.maximumf %30, %31 : vector<256x128xf32>
    %33 = arith.truncf %32 : vector<256x128xf32> to vector<256x128xbf16>
    %c0_24 = arith.constant 0 : index
    %c0_25 = arith.constant 0 : index
    %34 = vector.load %arg10[%c0_24, %c0_25] : memref<128x128xbf16, #tpu.memory_space<vmem>>, vector<128x128xbf16>
    %cst_26 = arith.constant dense<0.000000e+00> : vector<256x128xf32>
    %35 = tpu.matmul %33, %34, %cst_26 {dimension_numbers = #tpu.dot_dimension_numbers<[1], [0], [0], [1], [0, 0, 1, 1], [], []>} : vector<256x128xbf16>, vector<128x128xbf16>, vector<256x128xf32> -> vector<256x128xf32>
    %c0_27 = arith.constant 0 : index
    %c0_28 = arith.constant 0 : index
    %36 = vector.load %arg11[%c0_27, %c0_28] : memref<1x128xf32, #tpu.memory_space<vmem>>, vector<1x128xf32>
    %37 = vector.broadcast %36 : vector<1x128xf32> to vector<256x128xf32>
    %38 = arith.addf %35, %37 : vector<256x128xf32>
    %cst_29 = arith.constant 0.000000e+00 : f32
    %39 = vector.broadcast %cst_29 : f32 to vector<256x128xf32>
    %40 = arith.maximumf %38, %39 : vector<256x128xf32>
    %41 = arith.truncf %40 : vector<256x128xf32> to vector<256x128xbf16>
    %c0_30 = arith.constant 0 : index
    %c0_31 = arith.constant 0 : index
    %42 = vector.load %arg12[%c0_30, %c0_31] : memref<128x256xbf16, #tpu.memory_space<vmem>>, vector<128x256xbf16>
    %cst_32 = arith.constant dense<0.000000e+00> : vector<256x256xf32>
    %43 = tpu.matmul %41, %42, %cst_32 {dimension_numbers = #tpu.dot_dimension_numbers<[1], [0], [0], [1], [0, 0, 1, 1], [], []>} : vector<256x128xbf16>, vector<128x256xbf16>, vector<256x256xf32> -> vector<256x256xf32>
    %c0_33 = arith.constant 0 : index
    %c0_34 = arith.constant 0 : index
    %44 = vector.load %arg13[%c0_33, %c0_34] : memref<1x256xf32, #tpu.memory_space<vmem>>, vector<1x256xf32>
    %45 = vector.broadcast %44 : vector<1x256xf32> to vector<256x256xf32>
    %46 = arith.addf %43, %45 : vector<256x256xf32>
    %c0_35 = arith.constant 0 : index
    %c0_36 = arith.constant 0 : index
    %47 = vector.load %arg14[%c0_35, %c0_36] : memref<256x256xf32, #tpu.memory_space<vmem>>, vector<256x256xf32>
    tpu.vector_store %arg14[%c0_35, %c0_36], %46 {strides = array<i32>} : memref<256x256xf32, #tpu.memory_space<vmem>>, vector<256x256xf32>,
    return
  }
  func.func @transform_0(%arg0: i32) -> (i32, i32) {
    %c0_i32 = arith.constant 0 : i32
    %c0_i32_0 = arith.constant 0 : i32
    return %arg0, %c0_i32 : i32, i32
  }
  func.func @transform_1(%arg0: i32) -> (i32, i32) {
    %c0_i32 = arith.constant 0 : i32
    %c0_i32_0 = arith.constant 0 : i32
    %c0_i32_1 = arith.constant 0 : i32
    return %c0_i32, %c0_i32_0 : i32, i32
  }
  func.func @transform_2(%arg0: i32) -> (i32, i32) {
    %c0_i32 = arith.constant 0 : i32
    %c0_i32_0 = arith.constant 0 : i32
    %c0_i32_1 = arith.constant 0 : i32
    return %c0_i32, %c0_i32_0 : i32, i32
  }
  func.func @transform_3(%arg0: i32) -> (i32, i32) {
    %c0_i32 = arith.constant 0 : i32
    %c0_i32_0 = arith.constant 0 : i32
    %c0_i32_1 = arith.constant 0 : i32
    return %c0_i32, %c0_i32_0 : i32, i32
  }
  func.func @transform_4(%arg0: i32) -> (i32, i32) {
    %c0_i32 = arith.constant 0 : i32
    %c0_i32_0 = arith.constant 0 : i32
    %c0_i32_1 = arith.constant 0 : i32
    return %c0_i32, %c0_i32_0 : i32, i32
  }
  func.func @transform_5(%arg0: i32) -> (i32, i32) {
    %c0_i32 = arith.constant 0 : i32
    %c0_i32_0 = arith.constant 0 : i32
    %c0_i32_1 = arith.constant 0 : i32
    return %c0_i32, %c0_i32_0 : i32, i32
  }
  func.func @transform_6(%arg0: i32) -> (i32, i32) {
    %c0_i32 = arith.constant 0 : i32
    %c0_i32_0 = arith.constant 0 : i32
    %c0_i32_1 = arith.constant 0 : i32
    return %c0_i32, %c0_i32_0 : i32, i32
  }
  func.func @transform_7(%arg0: i32) -> (i32, i32) {
    %c0_i32 = arith.constant 0 : i32
    %c0_i32_0 = arith.constant 0 : i32
    %c0_i32_1 = arith.constant 0 : i32
    return %c0_i32, %c0_i32_0 : i32, i32
  }
  func.func @transform_8(%arg0: i32) -> (i32, i32) {
    %c0_i32 = arith.constant 0 : i32
    %c0_i32_0 = arith.constant 0 : i32
    %c0_i32_1 = arith.constant 0 : i32
    return %c0_i32, %c0_i32_0 : i32, i32
  }
  func.func @transform_9(%arg0: i32) -> (i32, i32) {
    %c0_i32 = arith.constant 0 : i32
    %c0_i32_0 = arith.constant 0 : i32
    %c0_i32_1 = arith.constant 0 : i32
    return %c0_i32, %c0_i32_0 : i32, i32
  }
  func.func @transform_10(%arg0: i32) -> (i32, i32) {
    %c0_i32 = arith.constant 0 : i32
    %c0_i32_0 = arith.constant 0 : i32
    %c0_i32_1 = arith.constant 0 : i32
    return %c0_i32, %c0_i32_0 : i32, i32
  }
  func.func @transform_11(%arg0: i32) -> (i32, i32) {
    %c0_i32 = arith.constant 0 : i32
    %c0_i32_0 = arith.constant 0 : i32
    %c0_i32_1 = arith.constant 0 : i32
    return %c0_i32, %c0_i32_0 : i32, i32
  }
  func.func @transform_12(%arg0: i32) -> (i32, i32) {
    %c0_i32 = arith.constant 0 : i32
    %c0_i32_0 = arith.constant 0 : i32
    %c0_i32_1 = arith.constant 0 : i32
    return %c0_i32, %c0_i32_0 : i32, i32
  }
  func.func @transform_13(%arg0: i32) -> (i32, i32) {
    %c0_i32 = arith.constant 0 : i32
    %c0_i32_0 = arith.constant 0 : i32
    return %arg0, %c0_i32 : i32, i32
  }
}

</mosaic_0001>

<llo_original>
// kernel: autoencoder_forward.1
$region0: #{autoencoder_forward.1}
  #allocation0 [shape = 'u32[]', space=smem, size = 0x4, offset = 0x4, fixed_abs, tag = 'smem constant byte address 0x4 - core index']
  #allocation1 [shape = 'u32[144,128]{1,0:T(1,128)}', space=vmem, size = 0x12000, scoped, tag = 'internal scratch']
  %s0 = inlined_call_operand.vmem [shape: f32[512,256], index: 0, kind: input, shape index: {}]
  %s1 = inlined_call_operand.vmem [shape: bf16[256,128], index: 1, kind: input, shape index: {}]
  %s2 = inlined_call_operand.vmem [shape: f32[1,128], index: 2, kind: input, shape index: {}]
  %s3 = inlined_call_operand.vmem [shape: bf16[128,128], index: 3, kind: input, shape index: {}]
  %s4 = inlined_call_operand.vmem [shape: f32[1,128], index: 4, kind: input, shape index: {}]
  %s5 = inlined_call_operand.vmem [shape: bf16[128,128], index: 5, kind: input, shape index: {}]
  %s6 = inlined_call_operand.vmem [shape: f32[1,128], index: 6, kind: input, shape index: {}]
  %s7 = inlined_call_operand.vmem [shape: bf16[128,128], index: 7, kind: input, shape index: {}]
  %s8 = inlined_call_operand.vmem [shape: f32[1,128], index: 8, kind: input, shape index: {}]
  %s9 = inlined_call_operand.vmem [shape: bf16[128,128], index: 9, kind: input, shape index: {}]
  %s10 = inlined_call_operand.vmem [shape: f32[1,128], index: 10, kind: input, shape index: {}]
  %s11 = inlined_call_operand.vmem [shape: bf16[128,256], index: 11, kind: input, shape index: {}]
  %s12 = inlined_call_operand.vmem [shape: f32[1,256], index: 12, kind: input, shape index: {}]
  %s13 = inlined_call_operand.hbm [shape: f32[512,256], index: 13, kind: output, shape index: {}]
  %s14 = sld [smem:[#allocation0]]
  $region85: #{autoencoder_forward.1} parent=0
    _
  %s16 = ssub.s32 1, %s14
  %s17 = scalar_select 0, %s16, %s14
  $region1: #{autoencoder_forward.1} parent=0
    #allocation2 [shape = 'u8[524288]{0}', space=vmem, size = 0x80000, scoped, tag = 'output window, operand 0']
    #allocation3 [shape = 's32[2]{0}', space=sflag, size = 0x8, scoped, tag = 'scoped memory for autoencoder_forward.1']
    %18 = vsyncpa [#allocation3], 0
    %s19 = scalar_lea.sflag [#allocation3], 1
    %20 = vsyncpa %s19, 0
    loop: start=0, step=1, limit=4
    $region2: #{autoencoder_forward.1} parent=1 // loop_pre_header
      _
    $region3: #{autoencoder_forward.1} parent=1 // loop_header
      %s22 = sphi 0, %s26
      %p23 = scmp.ge.s32.totalorder %s22, 4
      %s32 = sphi 0, %s34
      %s35 = sphi 0, %s32
      %s36 = sphi 0, %s35
      %s52 = sphi 0, %s36
      %s56 = sphi 0, %s56
      %s58 = sphi 0, %s56
      %s59 = sphi 0, %s58
      %s73 = sphi 0, %s59
      %s77 = sphi 0, %s77
      %s79 = sphi 0, %s77
      %s80 = sphi 0, %s79
      %s94 = sphi 0, %s80
      %s98 = sphi 0, %s98
      %s100 = sphi 0, %s98
      %s101 = sphi 0, %s100
      %s115 = sphi 0, %s101
      %s119 = sphi 0, %s119
      %s121 = sphi 0, %s119
      %s122 = sphi 0, %s121
      %s136 = sphi 0, %s122
      %s140 = sphi 0, %s140
      %s142 = sphi 0, %s140
      %s143 = sphi 0, %s142
      %s157 = sphi 0, %s143
      %s161 = sphi 0, %s161
      %s163 = sphi 0, %s161
      %s164 = sphi 0, %s163
      %s178 = sphi 0, %s164
      %s182 = sphi 0, %s182
      %s184 = sphi 0, %s182
      %s185 = sphi 0, %s184
      %s199 = sphi 0, %s185
      %s203 = sphi 0, %s203
      %s205 = sphi 0, %s203
      %s206 = sphi 0, %s205
      %s220 = sphi 0, %s206
      %s224 = sphi 0, %s224
      %s226 = sphi 0, %s224
      %s227 = sphi 0, %s226
      %s241 = sphi 0, %s227
      %s245 = sphi 0, %s245
      %s247 = sphi 0, %s245
      %s248 = sphi 0, %s247
      %s262 = sphi 0, %s248
      %s266 = sphi 0, %s266
      %s268 = sphi 0, %s266
      %s269 = sphi 0, %s268
      %s283 = sphi 0, %s269
      %s287 = sphi 0, %s287
      %s289 = sphi 0, %s287
      %s290 = sphi 0, %s289
      %s304 = sphi 0, %s290
      %s310 = sphi 0, %s312
      %s313 = sphi 0, %s310
      %s314 = sphi 0, %s313
      %s330 = sphi 0, %s314
    $region4: #{autoencoder_forward.1} parent=1 // loop_header_branch
      %25 = sbr.rel (%p23) target = $region8
    $region5: #{autoencoder_forward.1} parent=1 // loop_body
      %s27 = ssub.s32 %s22, 1
      %s28 = ssub.s32 %s22, 2
      %s29 = sadd.s32 %s22, 1
      %s30 = ssub.s32 %s22, %s29
      %p31 = scmp.eq.s32.totalorder %s30, 0
      %s33 = sadd.s32 %s32, 1
      %s34 = scalar_select %p31, %s32, %s33
      %p37 = pneg %p31
      %p38 = scmp.eq.s32.totalorder %s22, 1
      %p39 = por %p37, %p38
      %p40 = scmp.ne.s32.totalorder %s32, %s35
      %p41 = scmp.eq.s32.totalorder %s22, 0
      %p42 = por %p40, %p41
      %p43 = scmp.ne.s32.totalorder %s32, %s35
      %p44 = scmp.eq.s32.totalorder %s27, 1
      %p45 = por %p43, %p44
      %p46 = scmp.ne.s32.totalorder %s35, %s36
      %p47 = scmp.eq.s32.totalorder %s27, 0
      %p48 = por %p46, %p47
      %p49 = scmp.ne.s32.totalorder %s35, %s36
      %p50 = scmp.eq.s32.totalorder %s28, 1
      %p51 = por %p49, %p50
      %p53 = scmp.ne.s32.totalorder %s36, %s52
      %p54 = scmp.eq.s32.totalorder %s28, 0
      %p55 = por %p53, %p54
      %s57 = sadd.s32 %s56, 1
      %p60 = scmp.eq.s32.totalorder %s22, 1
      %p61 = scmp.ne.s32.totalorder %s56, %s58
      %p62 = scmp.eq.s32.totalorder %s22, 0
      %p63 = por %p61, %p62
      %p64 = scmp.ne.s32.totalorder %s56, %s58
      %p65 = scmp.eq.s32.totalorder %s27, 1
      %p66 = por %p64, %p65
      %p67 = scmp.ne.s32.totalorder %s58, %s59
      %p68 = scmp.eq.s32.totalorder %s27, 0
      %p69 = por %p67, %p68
      %p70 = scmp.ne.s32.totalorder %s58, %s59
      %p71 = scmp.eq.s32.totalorder %s28, 1
      %p72 = por %p70, %p71
      %p74 = scmp.ne.s32.totalorder %s59, %s73
      %p75 = scmp.eq.s32.totalorder %s28, 0
      %p76 = por %p74, %p75
      %s78 = sadd.s32 %s77, 1
      %p81 = scmp.eq.s32.totalorder %s22, 1
      %p82 = scmp.ne.s32.totalorder %s77, %s79
      %p83 = scmp.eq.s32.totalorder %s22, 0
      %p84 = por %p82, %p83
      %p85 = scmp.ne.s32.totalorder %s77, %s79
      %p86 = scmp.eq.s32.totalorder %s27, 1
      %p87 = por %p85, %p86
      %p88 = scmp.ne.s32.totalorder %s79, %s80
      %p89 = scmp.eq.s32.totalorder %s27, 0
      %p90 = por %p88, %p89
      %p91 = scmp.ne.s32.totalorder %s79, %s80
      %p92 = scmp.eq.s32.totalorder %s28, 1
      %p93 = por %p91, %p92
      %p95 = scmp.ne.s32.totalorder %s80, %s94
      %p96 = scmp.eq.s32.totalorder %s28, 0
      %p97 = por %p95, %p96
      %s99 = sadd.s32 %s98, 1
      %p102 = scmp.eq.s32.totalorder %s22, 1
      %p103 = scmp.ne.s32.totalorder %s98, %s100
      %p104 = scmp.eq.s32.totalorder %s22, 0
      %p105 = por %p103, %p104
      %p106 = scmp.ne.s32.totalorder %s98, %s100
      %p107 = scmp.eq.s32.totalorder %s27, 1
      %p108 = por %p106, %p107
      %p109 = scmp.ne.s32.totalorder %s100, %s101
      %p110 = scmp.eq.s32.totalorder %s27, 0
      %p111 = por %p109, %p110
      %p112 = scmp.ne.s32.totalorder %s100, %s101
      %p113 = scmp.eq.s32.totalorder %s28, 1
      %p114 = por %p112, %p113
      %p116 = scmp.ne.s32.totalorder %s101, %s115
      %p117 = scmp.eq.s32.totalorder %s28, 0
      %p118 = por %p116, %p117
      %s120 = sadd.s32 %s119, 1
      %p123 = scmp.eq.s32.totalorder %s22, 1
      %p124 = scmp.ne.s32.totalorder %s119, %s121
      %p125 = scmp.eq.s32.totalorder %s22, 0
      %p126 = por %p124, %p125
      %p127 = scmp.ne.s32.totalorder %s119, %s121
      %p128 = scmp.eq.s32.totalorder %s27, 1
      %p129 = por %p127, %p128
      %p130 = scmp.ne.s32.totalorder %s121, %s122
      %p131 = scmp.eq.s32.totalorder %s27, 0
      %p132 = por %p130, %p131
      %p133 = scmp.ne.s32.totalorder %s121, %s122
      %p134 = scmp.eq.s32.totalorder %s28, 1
      %p135 = por %p133, %p134
      %p137 = scmp.ne.s32.totalorder %s122, %s136
      %p138 = scmp.eq.s32.totalorder %s28, 0
      %p139 = por %p137, %p138
      %s141 = sadd.s32 %s140, 1
      %p144 = scmp.eq.s32.totalorder %s22, 1
      %p145 = scmp.ne.s32.totalorder %s140, %s142
      %p146 = scmp.eq.s32.totalorder %s22, 0
      %p147 = por %p145, %p146
      %p148 = scmp.ne.s32.totalorder %s140, %s142
      %p149 = scmp.eq.s32.totalorder %s27, 1
      %p150 = por %p148, %p149
      %p151 = scmp.ne.s32.totalorder %s142, %s143
      %p152 = scmp.eq.s32.totalorder %s27, 0
      %p153 = por %p151, %p152
      %p154 = scmp.ne.s32.totalorder %s142, %s143
      %p155 = scmp.eq.s32.totalorder %s28, 1
      %p156 = por %p154, %p155
      %p158 = scmp.ne.s32.totalorder %s143, %s157
      %p159 = scmp.eq.s32.totalorder %s28, 0
      %p160 = por %p158, %p159
      %s162 = sadd.s32 %s161, 1
      %p165 = scmp.eq.s32.totalorder %s22, 1
      %p166 = scmp.ne.s32.totalorder %s161, %s163
      %p167 = scmp.eq.s32.totalorder %s22, 0
      %p168 = por %p166, %p167
      %p169 = scmp.ne.s32.totalorder %s161, %s163
      %p170 = scmp.eq.s32.totalorder %s27, 1
      %p171 = por %p169, %p170
      %p172 = scmp.ne.s32.totalorder %s163, %s164
      %p173 = scmp.eq.s32.totalorder %s27, 0
      %p174 = por %p172, %p173
      %p175 = scmp.ne.s32.totalorder %s163, %s164
      %p176 = scmp.eq.s32.totalorder %s28, 1
      %p177 = por %p175, %p176
      %p179 = scmp.ne.s32.totalorder %s164, %s178
      %p180 = scmp.eq.s32.totalorder %s28, 0
      %p181 = por %p179, %p180
      %s183 = sadd.s32 %s182, 1
      %p186 = scmp.eq.s32.totalorder %s22, 1
      %p187 = scmp.ne.s32.totalorder %s182, %s184
      %p188 = scmp.eq.s32.totalorder %s22, 0
      %p189 = por %p187, %p188
      %p190 = scmp.ne.s32.totalorder %s182, %s184
      %p191 = scmp.eq.s32.totalorder %s27, 1
      %p192 = por %p190, %p191
      %p193 = scmp.ne.s32.totalorder %s184, %s185
      %p194 = scmp.eq.s32.totalorder %s27, 0
      %p195 = por %p193, %p194
      %p196 = scmp.ne.s32.totalorder %s184, %s185
      %p197 = scmp.eq.s32.totalorder %s28, 1
      %p198 = por %p196, %p197
      %p200 = scmp.ne.s32.totalorder %s185, %s199
      %p201 = scmp.eq.s32.totalorder %s28, 0
      %p202 = por %p200, %p201
      %s204 = sadd.s32 %s203, 1
      %p207 = scmp.eq.s32.totalorder %s22, 1
      %p208 = scmp.ne.s32.totalorder %s203, %s205
      %p209 = scmp.eq.s32.totalorder %s22, 0
      %p210 = por %p208, %p209
      %p211 = scmp.ne.s32.totalorder %s203, %s205
      %p212 = scmp.eq.s32.totalorder %s27, 1
      %p213 = por %p211, %p212
      %p214 = scmp.ne.s32.totalorder %s205, %s206
      %p215 = scmp.eq.s32.totalorder %s27, 0
      %p216 = por %p214, %p215
      %p217 = scmp.ne.s32.totalorder %s205, %s206
      %p218 = scmp.eq.s32.totalorder %s28, 1
      %p219 = por %p217, %p218
      %p221 = scmp.ne.s32.totalorder %s206, %s220
      %p222 = scmp.eq.s32.totalorder %s28, 0
      %p223 = por %p221, %p222
      %s225 = sadd.s32 %s224, 1
      %p228 = scmp.eq.s32.totalorder %s22, 1
      %p229 = scmp.ne.s32.totalorder %s224, %s226
      %p230 = scmp.eq.s32.totalorder %s22, 0
      %p231 = por %p229, %p230
      %p232 = scmp.ne.s32.totalorder %s224, %s226
      %p233 = scmp.eq.s32.totalorder %s27, 1
      %p234 = por %p232, %p233
      %p235 = scmp.ne.s32.totalorder %s226, %s227
      %p236 = scmp.eq.s32.totalorder %s27, 0
      %p237 = por %p235, %p236
      %p238 = scmp.ne.s32.totalorder %s226, %s227
      %p239 = scmp.eq.s32.totalorder %s28, 1
      %p240 = por %p238, %p239
      %p242 = scmp.ne.s32.totalorder %s227, %s241
      %p243 = scmp.eq.s32.totalorder %s28, 0
      %p244 = por %p242, %p243
      %s246 = sadd.s32 %s245, 1
      %p249 = scmp.eq.s32.totalorder %s22, 1
      %p250 = scmp.ne.s32.totalorder %s245, %s247
      %p251 = scmp.eq.s32.totalorder %s22, 0
      %p252 = por %p250, %p251
      %p253 = scmp.ne.s32.totalorder %s245, %s247
      %p254 = scmp.eq.s32.totalorder %s27, 1
      %p255 = por %p253, %p254
      %p256 = scmp.ne.s32.totalorder %s247, %s248
      %p257 = scmp.eq.s32.totalorder %s27, 0
      %p258 = por %p256, %p257
      %p259 = scmp.ne.s32.totalorder %s247, %s248
      %p260 = scmp.eq.s32.totalorder %s28, 1
      %p261 = por %p259, %p260
      %p263 = scmp.ne.s32.totalorder %s248, %s262
      %p264 = scmp.eq.s32.totalorder %s28, 0
      %p265 = por %p263, %p264
      %s267 = sadd.s32 %s266, 1
      %p270 = scmp.eq.s32.totalorder %s22, 1
      %p271 = scmp.ne.s32.totalorder %s266, %s268
      %p272 = scmp.eq.s32.totalorder %s22, 0
      %p273 = por %p271, %p272
      %p274 = scmp.ne.s32.totalorder %s266, %s268
      %p275 = scmp.eq.s32.totalorder %s27, 1
      %p276 = por %p274, %p275
      %p277 = scmp.ne.s32.totalorder %s268, %s269
      %p278 = scmp.eq.s32.totalorder %s27, 0
      %p279 = por %p277, %p278
      %p280 = scmp.ne.s32.totalorder %s268, %s269
      %p281 = scmp.eq.s32.totalorder %s28, 1
      %p282 = por %p280, %p281
      %p284 = scmp.ne.s32.totalorder %s269, %s283
      %p285 = scmp.eq.s32.totalorder %s28, 0
      %p286 = por %p284, %p285
      %s288 = sadd.s32 %s287, 1
      %p291 = scmp.eq.s32.totalorder %s22, 1
      %p292 = scmp.ne.s32.totalorder %s287, %s289
      %p293 = scmp.eq.s32.totalorder %s22, 0
      %p294 = por %p292, %p293
      %p295 = scmp.ne.s32.totalorder %s287, %s289
      %p296 = scmp.eq.s32.totalorder %s27, 1
      %p297 = por %p295, %p296
      %p298 = scmp.ne.s32.totalorder %s289, %s290
      %p299 = scmp.eq.s32.totalorder %s27, 0
      %p300 = por %p298, %p299
      %p301 = scmp.ne.s32.totalorder %s289, %s290
      %p302 = scmp.eq.s32.totalorder %s28, 1
      %p303 = por %p301, %p302
      %p305 = scmp.ne.s32.totalorder %s290, %s304
      %p306 = scmp.eq.s32.totalorder %s28, 0
      %p307 = por %p305, %p306
      %s308 = ssub.s32 %s22, %s29
      %p309 = scmp.eq.s32.totalorder %s308, 0
      %s311 = sadd.s32 %s310, 1
      %s312 = scalar_select %p309, %s310, %s311
      %p315 = pneg %p309
      %p316 = scmp.eq.s32.totalorder %s22, 1
      %p317 = por %p315, %p316
      %p318 = scmp.ne.s32.totalorder %s310, %s313
      %p319 = scmp.eq.s32.totalorder %s22, 0
      %p320 = por %p318, %p319
      %p321 = scmp.ne.s32.totalorder %s310, %s313
      %p322 = scmp.eq.s32.totalorder %s27, 1
      %p323 = por %p321, %p322
      %p324 = scmp.ne.s32.totalorder %s313, %s314
      %p325 = scmp.eq.s32.totalorder %s27, 0
      %p326 = por %p324, %p325
      %p327 = scmp.ne.s32.totalorder %s313, %s314
      %p328 = scmp.eq.s32.totalorder %s28, 1
      %p329 = por %p327, %p328
      %p331 = scmp.ne.s32.totalorder %s314, %s330
      %p332 = scmp.eq.s32.totalorder %s28, 0
      %p333 = por %p331, %p332
      %p334 = scmp.le.s32.totalorder 1, %s22
      %p335 = scmp.lt.s32.totalorder %s22, 3
      %p336 = pnand %p334, %p335
      %p337 = pneg %p336
      // Predicated region
      $region9: #{autoencoder_forward.1} parent=5 // pred_check
        _
      $region10: #{autoencoder_forward.1} parent=5 // pred_check_branch
        %339 = sbr.rel (%p336) target = $region12
      $region11: #{autoencoder_forward.1} parent=5 // pred_region
        %s340 = ssub.s32 %s22, 1
        // Predicated region
        $region13: #{autoencoder_forward.1} parent=11 // pred_check
          %p341 = pneg %p69
        $region14: #{autoencoder_forward.1} parent=11 // pred_check_branch
          %343 = sbr.rel (%p341) target = $region16
        $region15: #{autoencoder_forward.1} parent=11 // pred_region
          _
        $region16: #{autoencoder_forward.1} parent=11 // pred_fallthru
          _
        // Predicated region
        $region17: #{autoencoder_forward.1} parent=11 // pred_check
          %p344 = pneg %p90
        $region18: #{autoencoder_forward.1} parent=11 // pred_check_branch
          %346 = sbr.rel (%p344) target = $region20
        $region19: #{autoencoder_forward.1} parent=11 // pred_region
          _
        $region20: #{autoencoder_forward.1} parent=11 // pred_fallthru
          _
        // Predicated region
        $region21: #{autoencoder_forward.1} parent=11 // pred_check
          %p347 = pneg %p111
        $region22: #{autoencoder_forward.1} parent=11 // pred_check_branch
          %349 = sbr.rel (%p347) target = $region24
        $region23: #{autoencoder_forward.1} parent=11 // pred_region
          _
        $region24: #{autoencoder_forward.1} parent=11 // pred_fallthru
          _
        // Predicated region
        $region25: #{autoencoder_forward.1} parent=11 // pred_check
          %p350 = pneg %p132
        $region26: #{autoencoder_forward.1} parent=11 // pred_check_branch
          %352 = sbr.rel (%p350) target = $region28
        $region27: #{autoencoder_forward.1} parent=11 // pred_region
          _
        $region28: #{autoencoder_forward.1} parent=11 // pred_fallthru
          _
        // Predicated region
        $region29: #{autoencoder_forward.1} parent=11 // pred_check
          %p353 = pneg %p153
        $region30: #{autoencoder_forward.1} parent=11 // pred_check_branch
          %355 = sbr.rel (%p353) target = $region32
        $region31: #{autoencoder_forward.1} parent=11 // pred_region
          _
        $region32: #{autoencoder_forward.1} parent=11 // pred_fallthru
          _
        // Predicated region
        $region33: #{autoencoder_forward.1} parent=11 // pred_check
          %p356 = pneg %p174
        $region34: #{autoencoder_forward.1} parent=11 // pred_check_branch
          %358 = sbr.rel (%p356) target = $region36
        $region35: #{autoencoder_forward.1} parent=11 // pred_region
          _
        $region36: #{autoencoder_forward.1} parent=11 // pred_fallthru
          _
        // Predicated region
        $region37: #{autoencoder_forward.1} parent=11 // pred_check
          %p359 = pneg %p195
        $region38: #{autoencoder_forward.1} parent=11 // pred_check_branch
          %361 = sbr.rel (%p359) target = $region40
        $region39: #{autoencoder_forward.1} parent=11 // pred_region
          _
        $region40: #{autoencoder_forward.1} parent=11 // pred_fallthru
          _
        // Predicated region
        $region41: #{autoencoder_forward.1} parent=11 // pred_check
          %p362 = pneg %p216
        $region42: #{autoencoder_forward.1} parent=11 // pred_check_branch
          %364 = sbr.rel (%p362) target = $region44
        $region43: #{autoencoder_forward.1} parent=11 // pred_region
          _
        $region44: #{autoencoder_forward.1} parent=11 // pred_fallthru
          _
        // Predicated region
        $region45: #{autoencoder_forward.1} parent=11 // pred_check
          %p365 = pneg %p237
        $region46: #{autoencoder_forward.1} parent=11 // pred_check_branch
          %367 = sbr.rel (%p365) target = $region48
        $region47: #{autoencoder_forward.1} parent=11 // pred_region
          _
        $region48: #{autoencoder_forward.1} parent=11 // pred_fallthru
          _
        // Predicated region
        $region49: #{autoencoder_forward.1} parent=11 // pred_check
          %p368 = pneg %p258
        $region50: #{autoencoder_forward.1} parent=11 // pred_check_branch
          %370 = sbr.rel (%p368) target = $region52
        $region51: #{autoencoder_forward.1} parent=11 // pred_region
          _
        $region52: #{autoencoder_forward.1} parent=11 // pred_fallthru
          _
        // Predicated region
        $region53: #{autoencoder_forward.1} parent=11 // pred_check
          %p371 = pneg %p279
        $region54: #{autoencoder_forward.1} parent=11 // pred_check_branch
          %373 = sbr.rel (%p371) target = $region56
        $region55: #{autoencoder_forward.1} parent=11 // pred_region
          _
        $region56: #{autoencoder_forward.1} parent=11 // pred_fallthru
          _
        // Predicated region
        $region57: #{autoencoder_forward.1} parent=11 // pred_check
          %p374 = pneg %p300
        $region58: #{autoencoder_forward.1} parent=11 // pred_check_branch
          %376 = sbr.rel (%p374) target = $region60
        $region59: #{autoencoder_forward.1} parent=11 // pred_region
          _
        $region60: #{autoencoder_forward.1} parent=11 // pred_fallthru
          _
      $region12: #{autoencoder_forward.1} parent=5 // pred_fallthru
        _
      %p377 = scmp.lt.s32.totalorder %s22, 2
      // Predicated region
      $region61: #{autoencoder_forward.1} parent=5 // pred_check
        %p378 = pneg %p377
      $region62: #{autoencoder_forward.1} parent=5 // pred_check_branch
        %380 = sbr.rel (%p378) target = $region64
      $region63: #{autoencoder_forward.1} parent=5 // pred_region
        // Predicated region
        $region65: #{autoencoder_forward.1} parent=63 // pred_check
          %p381 = pneg %p42
        $region66: #{autoencoder_forward.1} parent=63 // pred_check_branch
          %383 = sbr.rel (%p381) target = $region68
        $region67: #{autoencoder_forward.1} parent=63 // pred_region
          %s384 = smul.u32 32, %s22
          %p385 = scmp.lt.s32.totalorder %s384, 63
          %s386 = scalar_select %p385, %s384, 63
          %s387 = smul.addr %s386, 2
          %s388 = smul.addr %s387, 8
          %s389 = scalar_lea.vmem %s0, %s388
          %s390 = smul.u32 32, %s22
        $region68: #{autoencoder_forward.1} parent=63 // pred_fallthru
          _
      $region64: #{autoencoder_forward.1} parent=5 // pred_fallthru
        _
      %p391 = scmp.le.s32.totalorder 1, %s22
      %p392 = scmp.lt.s32.totalorder %s22, 3
      %p393 = pnand %p391, %p392
      %p394 = pneg %p393
      // Predicated region
      $region69: #{autoencoder_forward.1} parent=5 // pred_check
        _
      $region70: #{autoencoder_forward.1} parent=5 // pred_check_branch
        %396 = sbr.rel (%p393) target = $region72
      $region71: #{autoencoder_forward.1} parent=5 // pred_region
        %s397 = ssub.s32 %s22, 1
        %s398 = smul.u32 32, %s27
        %p399 = scmp.lt.s32.totalorder %s398, 63
        %s400 = scalar_select %p399, %s398, 63
        %s401 = smul.addr %s400, 2
        %s402 = smul.addr %s401, 8
        %s403 = scalar_lea.vmem %s0, %s402
        %p404 = pneg %p48
        %p405 = pneg %p45
        %p406 = pneg %p69
        %p407 = pneg %p66
        %p408 = pneg %p90
        %p409 = pneg %p87
        %p410 = pneg %p111
        %p411 = pneg %p108
        %p412 = pneg %p132
        %p413 = pneg %p129
        %p414 = pneg %p153
        %p415 = pneg %p150
        %p416 = pneg %p174
        %p417 = pneg %p171
        %p418 = pneg %p195
        %p419 = pneg %p192
        %p420 = pneg %p216
        %p421 = pneg %p213
        %p422 = pneg %p237
        %p423 = pneg %p234
        %p424 = pneg %p258
        %p425 = pneg %p255
        %p426 = pneg %p279
        %p427 = pneg %p276
        %p428 = pneg %p300
        %p429 = pneg %p297
        %p430 = pneg %p326
        %p431 = pneg %p323
        %s432 = sand.u32 %s313, 1
        %s433 = scalar_lea.sflag [#allocation3], %s432
        %s434 = sand.u32 %s313, 1
        %s435 = smul.addr %s434, 512
        %s436 = scalar_lea.vmem [#allocation2], %s435
        %s437 = smul.u32 32, %s27
        %p438 = scmp.lt.s32.totalorder %s437, 63
        %s439 = scalar_select %p438, %s437, 63
        %s440 = smul.addr %s439, 2
        %s441 = smul.addr %s440, 8
        %s442 = scalar_lea.vmem %s0, %s441
        %s443 = smul.u32 32, %s27
        %s444 = smul.u32 32, %s27
        %v446 = vld [vmem:[%s442] sm:$0xff]
        %v447 = vld [vmem:[%s442 + $0x8] sm:$0xff]
        %v448 = vld [vmem:[%s442 + $0x10] sm:$0xff]
        %v449 = vld [vmem:[%s442 + $0x18] sm:$0xff]
        %v450 = vld [vmem:[%s442 + $0x20] sm:$0xff]
        %v451 = vld [vmem:[%s442 + $0x28] sm:$0xff]
        %v452 = vld [vmem:[%s442 + $0x30] sm:$0xff]
        %v453 = vld [vmem:[%s442 + $0x38] sm:$0xff]
        %v454 = vld [vmem:[%s442 + $0x40] sm:$0xff]
        %v455 = vld [vmem:[%s442 + $0x48] sm:$0xff]
        %v456 = vld [vmem:[%s442 + $0x50] sm:$0xff]
        %v457 = vld [vmem:[%s442 + $0x58] sm:$0xff]
        %v458 = vld [vmem:[%s442 + $0x60] sm:$0xff]
        %v459 = vld [vmem:[%s442 + $0x68] sm:$0xff]
        %v460 = vld [vmem:[%s442 + $0x70] sm:$0xff]
        %v461 = vld [vmem:[%s442 + $0x78] sm:$0xff]
        %v462 = vld [vmem:[%s442 + $0x80] sm:$0xff]
        %v463 = vld [vmem:[%s442 + $0x88] sm:$0xff]
        %v464 = vld [vmem:[%s442 + $0x90] sm:$0xff]
        %v465 = vld [vmem:[%s442 + $0x98] sm:$0xff]
        %v466 = vld [vmem:[%s442 + $0xa0] sm:$0xff]
        %v467 = vld [vmem:[%s442 + $0xa8] sm:$0xff]
        %v468 = vld [vmem:[%s442 + $0xb0] sm:$0xff]
        %v469 = vld [vmem:[%s442 + $0xb8] sm:$0xff]
        %v470 = vld [vmem:[%s442 + $0xc0] sm:$0xff]
        %v471 = vld [vmem:[%s442 + $0xc8] sm:$0xff]
        %v472 = vld [vmem:[%s442 + $0xd0] sm:$0xff]
        %v473 = vld [vmem:[%s442 + $0xd8] sm:$0xff]
        %v474 = vld [vmem:[%s442 + $0xe0] sm:$0xff]
        %v475 = vld [vmem:[%s442 + $0xe8] sm:$0xff]
        %v476 = vld [vmem:[%s442 + $0xf0] sm:$0xff]
        %v477 = vld [vmem:[%s442 + $0xf8] sm:$0xff]
        %v478 = vld [vmem:[%s442 + $0x100] sm:$0xff]
        %v479 = vld [vmem:[%s442 + $0x108] sm:$0xff]
        %v480 = vld [vmem:[%s442 + $0x110] sm:$0xff]
        %v481 = vld [vmem:[%s442 + $0x118] sm:$0xff]
        %v482 = vld [vmem:[%s442 + $0x120] sm:$0xff]
        %v483 = vld [vmem:[%s442 + $0x128] sm:$0xff]
        %v484 = vld [vmem:[%s442 + $0x130] sm:$0xff]
        %v485 = vld [vmem:[%s442 + $0x138] sm:$0xff]
        %v486 = vld [vmem:[%s442 + $0x140] sm:$0xff]
        %v487 = vld [vmem:[%s442 + $0x148] sm:$0xff]
        %v488 = vld [vmem:[%s442 + $0x150] sm:$0xff]
        %v489 = vld [vmem:[%s442 + $0x158] sm:$0xff]
        %v490 = vld [vmem:[%s442 + $0x160] sm:$0xff]
        %v491 = vld [vmem:[%s442 + $0x168] sm:$0xff]
        %v492 = vld [vmem:[%s442 + $0x170] sm:$0xff]
        %v493 = vld [vmem:[%s442 + $0x178] sm:$0xff]
        %v494 = vld [vmem:[%s442 + $0x180] sm:$0xff]
        %v495 = vld [vmem:[%s442 + $0x188] sm:$0xff]
        %v496 = vld [vmem:[%s442 + $0x190] sm:$0xff]
        %v497 = vld [vmem:[%s442 + $0x198] sm:$0xff]
        %v498 = vld [vmem:[%s442 + $0x1a0] sm:$0xff]
        %v499 = vld [vmem:[%s442 + $0x1a8] sm:$0xff]
        %v500 = vld [vmem:[%s442 + $0x1b0] sm:$0xff]
        %v501 = vld [vmem:[%s442 + $0x1b8] sm:$0xff]
        %v502 = vld [vmem:[%s442 + $0x1c0] sm:$0xff]
        %v503 = vld [vmem:[%s442 + $0x1c8] sm:$0xff]
        %v504 = vld [vmem:[%s442 + $0x1d0] sm:$0xff]
        %v505 = vld [vmem:[%s442 + $0x1d8] sm:$0xff]
        %v506 = vld [vmem:[%s442 + $0x1e0] sm:$0xff]
        %v507 = vld [vmem:[%s442 + $0x1e8] sm:$0xff]
        %v508 = vld [vmem:[%s442 + $0x1f0] sm:$0xff]
        %v509 = vld [vmem:[%s442 + $0x1f8] sm:$0xff]
        %v510 = vpack.c.bf16 %v448, %v446
        %v511 = vpack.c.bf16 %v449, %v447
        %v512 = vpack.c.bf16 %v452, %v450
        %v513 = vpack.c.bf16 %v453, %v451
        %v514 = vpack.c.bf16 %v456, %v454
        %v515 = vpack.c.bf16 %v457, %v455
        %v516 = vpack.c.bf16 %v460, %v458
        %v517 = vpack.c.bf16 %v461, %v459
        %v518 = vpack.c.bf16 %v464, %v462
        %v519 = vpack.c.bf16 %v465, %v463
        %v520 = vpack.c.bf16 %v468, %v466
        %v521 = vpack.c.bf16 %v469, %v467
        %v522 = vpack.c.bf16 %v472, %v470
        %v523 = vpack.c.bf16 %v473, %v471
        %v524 = vpack.c.bf16 %v476, %v474
        %v525 = vpack.c.bf16 %v477, %v475
        %v526 = vpack.c.bf16 %v480, %v478
        %v527 = vpack.c.bf16 %v481, %v479
        %v528 = vpack.c.bf16 %v484, %v482
        %v529 = vpack.c.bf16 %v485, %v483
        %v530 = vpack.c.bf16 %v488, %v486
        %v531 = vpack.c.bf16 %v489, %v487
        %v532 = vpack.c.bf16 %v492, %v490
        %v533 = vpack.c.bf16 %v493, %v491
        %v534 = vpack.c.bf16 %v496, %v494
        %v535 = vpack.c.bf16 %v497, %v495
        %v536 = vpack.c.bf16 %v500, %v498
        %v537 = vpack.c.bf16 %v501, %v499
        %v538 = vpack.c.bf16 %v504, %v502
        %v539 = vpack.c.bf16 %v505, %v503
        %v540 = vpack.c.bf16 %v508, %v506
        %v541 = vpack.c.bf16 %v509, %v507
        %v542 = vld [vmem:[%s1] sm:$0xf]
        %v543 = vld [vmem:[%s1 + $0x4] sm:$0xf]
        %v544 = vld [vmem:[%s1 + $0x8] sm:$0xf]
        %v545 = vld [vmem:[%s1 + $0xc] sm:$0xf]
        %v546 = vld [vmem:[%s1 + $0x10] sm:$0xf]
        %v547 = vld [vmem:[%s1 + $0x14] sm:$0xf]
        %v548 = vld [vmem:[%s1 + $0x18] sm:$0xf]
        %v549 = vld [vmem:[%s1 + $0x1c] sm:$0xf]
        %v550 = vld [vmem:[%s1 + $0x20] sm:$0xf]
        %v551 = vld [vmem:[%s1 + $0x24] sm:$0xf]
        %v552 = vld [vmem:[%s1 + $0x28] sm:$0xf]
        %v553 = vld [vmem:[%s1 + $0x2c] sm:$0xf]
        %v554 = vld [vmem:[%s1 + $0x30] sm:$0xf]
        %v555 = vld [vmem:[%s1 + $0x34] sm:$0xf]
        %v556 = vld [vmem:[%s1 + $0x38] sm:$0xf]
        %v557 = vld [vmem:[%s1 + $0x3c] sm:$0xf]
        %v558 = vld [vmem:[%s1 + $0x40] sm:$0xf]
        %v559 = vld [vmem:[%s1 + $0x44] sm:$0xf]
        %v560 = vld [vmem:[%s1 + $0x48] sm:$0xf]
        %v561 = vld [vmem:[%s1 + $0x4c] sm:$0xf]
        %v562 = vld [vmem:[%s1 + $0x50] sm:$0xf]
        %v563 = vld [vmem:[%s1 + $0x54] sm:$0xf]
        %v564 = vld [vmem:[%s1 + $0x58] sm:$0xf]
        %v565 = vld [vmem:[%s1 + $0x5c] sm:$0xf]
        %v566 = vld [vmem:[%s1 + $0x60] sm:$0xf]
        %v567 = vld [vmem:[%s1 + $0x64] sm:$0xf]
        %v568 = vld [vmem:[%s1 + $0x68] sm:$0xf]
        %v569 = vld [vmem:[%s1 + $0x6c] sm:$0xf]
        %v570 = vld [vmem:[%s1 + $0x70] sm:$0xf]
        %v571 = vld [vmem:[%s1 + $0x74] sm:$0xf]
        %v572 = vld [vmem:[%s1 + $0x78] sm:$0xf]
        %v573 = vld [vmem:[%s1 + $0x7c] sm:$0xf]
        %v574 = vld [vmem:[%s2] sm:$0x1]
        %v576 = vlaneseq
        %v577 = vshrl.u32 %v576, 7
        %v578 = vsub.s32 0, %v577
        %v579 = vrot.slane %v574, %v578
        %v613 = vunpack.c.l.b16 %v542
        %v614 = vunpack.c.l.b16 %v543
        %v615 = vunpack.c.l.b16 %v544
        %v616 = vunpack.c.l.b16 %v545
        %v617 = vunpack.c.l.b16 %v546
        %v618 = vunpack.c.l.b16 %v547
        %v619 = vunpack.c.l.b16 %v548
        %v620 = vunpack.c.l.b16 %v549
        %v621 = vunpack.c.l.b16 %v550
        %v622 = vunpack.c.l.b16 %v551
        %v623 = vunpack.c.l.b16 %v552
        %v624 = vunpack.c.l.b16 %v553
        %v625 = vunpack.c.l.b16 %v554
        %v626 = vunpack.c.l.b16 %v555
        %v627 = vunpack.c.l.b16 %v556
        %v628 = vunpack.c.l.b16 %v557
        %v629 = vunpack.c.l.b16 %v558
        %v630 = vunpack.c.l.b16 %v559
        %v631 = vunpack.c.l.b16 %v560
        %v632 = vunpack.c.l.b16 %v561
        %v633 = vunpack.c.l.b16 %v562
        %v634 = vunpack.c.l.b16 %v563
        %v635 = vunpack.c.l.b16 %v564
        %v636 = vunpack.c.l.b16 %v565
        %v637 = vunpack.c.l.b16 %v566
        %v638 = vunpack.c.l.b16 %v567
        %v639 = vunpack.c.l.b16 %v568
        %v640 = vunpack.c.l.b16 %v569
        %v641 = vunpack.c.l.b16 %v570
        %v642 = vunpack.c.l.b16 %v571
        %v643 = vunpack.c.l.b16 %v572
        %v644 = vunpack.c.l.b16 %v573
        %v645 = vpack.c.b16 %v614, %v613
        %v646 = vpack.c.b16 %v616, %v615
        %v647 = vpack.c.b16 %v618, %v617
        %v648 = vpack.c.b16 %v620, %v619
        %v649 = vpack.c.b16 %v622, %v621
        %v650 = vpack.c.b16 %v624, %v623
        %v651 = vpack.c.b16 %v626, %v625
        %v652 = vpack.c.b16 %v628, %v627
        %v653 = vpack.c.b16 %v630, %v629
        %v654 = vpack.c.b16 %v632, %v631
        %v655 = vpack.c.b16 %v634, %v633
        %v656 = vpack.c.b16 %v636, %v635
        %v657 = vpack.c.b16 %v638, %v637
        %v658 = vpack.c.b16 %v640, %v639
        %v659 = vpack.c.b16 %v642, %v641
        %v660 = vpack.c.b16 %v644, %v643
        %677 = vmatprep.subr.bf16.mxu0 0
        %678 = vmatpush1.bf16.msra.mxu0 %v645
        %679 = vmatprep.subr.bf16.mxu0 0
        %680 = vmatpush1.bf16.msra.mxu0 %v646
        %681 = vmatprep.subr.bf16.mxu0 0
        %682 = vmatpush1.bf16.msra.mxu0 %v647
        %683 = vmatprep.subr.bf16.mxu0 0
        %684 = vmatpush1.bf16.msra.mxu0 %v648
        %685 = vmatprep.subr.bf16.mxu0 0
        %686 = vmatpush1.bf16.msra.mxu0 %v649
        %687 = vmatprep.subr.bf16.mxu0 0
        %688 = vmatpush1.bf16.msra.mxu0 %v650
        %689 = vmatprep.subr.bf16.mxu0 0
        %690 = vmatpush1.bf16.msra.mxu0 %v651
        %691 = vmatprep.subr.bf16.mxu0 0
        %692 = vmatpush1.bf16.msra.mxu0 %v652
        %693 = vmatprep.subr.bf16.mxu0 0
        %694 = vmatpush1.bf16.msra.mxu0 %v653
        %695 = vmatprep.subr.bf16.mxu0 0
        %696 = vmatpush1.bf16.msra.mxu0 %v654
        %697 = vmatprep.subr.bf16.mxu0 0
        %698 = vmatpush1.bf16.msra.mxu0 %v655
        %699 = vmatprep.subr.bf16.mxu0 0
        %700 = vmatpush1.bf16.msra.mxu0 %v656
        %701 = vmatprep.subr.bf16.mxu0 0
        %702 = vmatpush1.bf16.msra.mxu0 %v657
        %703 = vmatprep.subr.bf16.mxu0 0
        %704 = vmatpush1.bf16.msra.mxu0 %v658
        %705 = vmatprep.subr.bf16.mxu0 0
        %706 = vmatpush1.bf16.msra.mxu0 %v659
        %707 = vmatprep.subr.bf16.mxu0 0
        %708 = vmatpush1.bf16.msra.mxu0 %v660
        %709 = vmatprep.mubr.bf16.mxu0 %v511
        %710 = vmatmul.mubr.bf16.gmra.mrb[0].mxu0 %v510
        %v711 = vpop.f32.mrb[0].mxu0
        %v712 = vadd.f32 %v579, %v711
        %v713 = vpop.f32.mrb[0].mxu0
        %v714 = vpop.f32.mrb[0].mxu0
        %v715 = vadd.f32 %v579, %v714
        %v716 = vpop.f32.mrb[0].mxu0
        %717 = vmatprep.mubr.bf16.mxu0 %v513
        %718 = vmatmul.mubr.bf16.gmra.mrb[0].mxu0 %v512
        %v719 = vpop.f32.mrb[0].mxu0
        %v720 = vadd.f32 %v579, %v719
        %v721 = vpop.f32.mrb[0].mxu0
        %v722 = vpop.f32.mrb[0].mxu0
        %v723 = vadd.f32 %v579, %v722
        %v724 = vpop.f32.mrb[0].mxu0
        %725 = vmatprep.mubr.bf16.mxu0 %v515
        %726 = vmatmul.mubr.bf16.gmra.mrb[0].mxu0 %v514
        %v727 = vpop.f32.mrb[0].mxu0
        %v728 = vadd.f32 %v579, %v727
        %v729 = vpop.f32.mrb[0].mxu0
        %v730 = vpop.f32.mrb[0].mxu0
        %v731 = vadd.f32 %v579, %v730
        %v732 = vpop.f32.mrb[0].mxu0
        %733 = vmatprep.mubr.bf16.mxu0 %v517
        %734 = vmatmul.mubr.bf16.gmra.mrb[0].mxu0 %v516
        %v735 = vpop.f32.mrb[0].mxu0
        %v736 = vadd.f32 %v579, %v735
        %v737 = vpop.f32.mrb[0].mxu0
        %v738 = vpop.f32.mrb[0].mxu0
        %v739 = vadd.f32 %v579, %v738
        %v740 = vpop.f32.mrb[0].mxu0
        %741 = vmatprep.mubr.bf16.mxu0 %v519
        %742 = vmatmul.mubr.bf16.gmra.mrb[0].mxu0 %v518
        %v743 = vpop.f32.mrb[0].mxu0
        %v744 = vadd.f32 %v579, %v743
        %v745 = vpop.f32.mrb[0].mxu0
        %v746 = vpop.f32.mrb[0].mxu0
        %v747 = vadd.f32 %v579, %v746
        %v748 = vpop.f32.mrb[0].mxu0
        %749 = vmatprep.mubr.bf16.mxu0 %v521
        %750 = vmatmul.mubr.bf16.gmra.mrb[0].mxu0 %v520
        %v751 = vpop.f32.mrb[0].mxu0
        %v752 = vadd.f32 %v579, %v751
        %v753 = vpop.f32.mrb[0].mxu0
        %v754 = vpop.f32.mrb[0].mxu0
        %v755 = vadd.f32 %v579, %v754
        %v756 = vpop.f32.mrb[0].mxu0
        %757 = vmatprep.mubr.bf16.mxu0 %v523
        %758 = vmatmul.mubr.bf16.gmra.mrb[0].mxu0 %v522
        %v759 = vpop.f32.mrb[0].mxu0
        %v760 = vadd.f32 %v579, %v759
        %v761 = vpop.f32.mrb[0].mxu0
        %v762 = vpop.f32.mrb[0].mxu0
        %v763 = vadd.f32 %v579, %v762
        %v764 = vpop.f32.mrb[0].mxu0
        %765 = vmatprep.mubr.bf16.mxu0 %v525
        %766 = vmatmul.mubr.bf16.gmra.mrb[0].mxu0 %v524
        %v767 = vpop.f32.mrb[0].mxu0
        %v768 = vadd.f32 %v579, %v767
        %v769 = vpop.f32.mrb[0].mxu0
        %v770 = vpop.f32.mrb[0].mxu0
        %v771 = vadd.f32 %v579, %v770
        %v772 = vpop.f32.mrb[0].mxu0
        %773 = vmatprep.mubr.bf16.mxu0 %v527
        %774 = vmatmul.mubr.bf16.gmra.mrb[0].mxu0 %v526
        %v775 = vpop.f32.mrb[0].mxu0
        %v776 = vadd.f32 %v579, %v775
        %v777 = vpop.f32.mrb[0].mxu0
        %v778 = vpop.f32.mrb[0].mxu0
        %v779 = vadd.f32 %v579, %v778
        %v780 = vpop.f32.mrb[0].mxu0
        %781 = vmatprep.mubr.bf16.mxu0 %v529
        %782 = vmatmul.mubr.bf16.gmra.mrb[0].mxu0 %v528
        %v783 = vpop.f32.mrb[0].mxu0
        %v784 = vadd.f32 %v579, %v783
        %v785 = vpop.f32.mrb[0].mxu0
        %v786 = vpop.f32.mrb[0].mxu0
        %v787 = vadd.f32 %v579, %v786
        %v788 = vpop.f32.mrb[0].mxu0
        %789 = vmatprep.mubr.bf16.mxu0 %v531
        %790 = vmatmul.mubr.bf16.gmra.mrb[0].mxu0 %v530
        %v791 = vpop.f32.mrb[0].mxu0
        %v792 = vadd.f32 %v579, %v791
        %v793 = vpop.f32.mrb[0].mxu0
        %v794 = vpop.f32.mrb[0].mxu0
        %v795 = vadd.f32 %v579, %v794
        %v796 = vpop.f32.mrb[0].mxu0
        %797 = vmatprep.mubr.bf16.mxu0 %v533
        %798 = vmatmul.mubr.bf16.gmra.mrb[0].mxu0 %v532
        %v799 = vpop.f32.mrb[0].mxu0
        %v800 = vadd.f32 %v579, %v799
        %v801 = vpop.f32.mrb[0].mxu0
        %v802 = vpop.f32.mrb[0].mxu0
        %v803 = vadd.f32 %v579, %v802
        %v804 = vpop.f32.mrb[0].mxu0
        %805 = vmatprep.mubr.bf16.mxu0 %v535
        %806 = vmatmul.mubr.bf16.gmra.mrb[0].mxu0 %v534
        %v807 = vpop.f32.mrb[0].mxu0
        %v808 = vadd.f32 %v579, %v807
        %v809 = vpop.f32.mrb[0].mxu0
        %v810 = vpop.f32.mrb[0].mxu0
        %v811 = vadd.f32 %v579, %v810
        %v812 = vpop.f32.mrb[0].mxu0
        %813 = vmatprep.mubr.bf16.mxu0 %v537
        %814 = vmatmul.mubr.bf16.gmra.mrb[0].mxu0 %v536
        %v815 = vpop.f32.mrb[0].mxu0
        %v816 = vadd.f32 %v579, %v815
        %v817 = vpop.f32.mrb[0].mxu0
        %v818 = vpop.f32.mrb[0].mxu0
        %v819 = vadd.f32 %v579, %v818
        %v820 = vpop.f32.mrb[0].mxu0
        %821 = vmatprep.mubr.bf16.mxu0 %v539
        %822 = vmatmul.mubr.bf16.gmra.mrb[0].mxu0 %v538
        %v823 = vpop.f32.mrb[0].mxu0
        %v824 = vadd.f32 %v579, %v823
        %v825 = vpop.f32.mrb[0].mxu0
        %v826 = vpop.f32.mrb[0].mxu0
        %v827 = vadd.f32 %v579, %v826
        %v828 = vpop.f32.mrb[0].mxu0
        %829 = vmatprep.mubr.bf16.mxu0 %v541
        %830 = vmatmul.mubr.bf16.gmra.mrb[0].mxu0 %v540
        %v831 = vpop.f32.mrb[0].mxu0
        %v832 = vadd.f32 %v579, %v831
        %v833 = vpop.f32.mrb[0].mxu0
        %v834 = vpop.f32.mrb[0].mxu0
        %v835 = vadd.f32 %v579, %v834
        %v836 = vpop.f32.mrb[0].mxu0
        %837 = vdwg.mxu0
        %v838 = vmax.f32 %v712, 0.0
        %v839 = vmax.f32 %v715, 0.0
        %v840 = vmax.f32 %v720, 0.0
        %v841 = vmax.f32 %v723, 0.0
        %v842 = vmax.f32 %v728, 0.0
        %v843 = vmax.f32 %v731, 0.0
        %v844 = vmax.f32 %v736, 0.0
        %v845 = vmax.f32 %v739, 0.0
        %v846 = vmax.f32 %v744, 0.0
        %v847 = vmax.f32 %v747, 0.0
        %v848 = vmax.f32 %v752, 0.0
        %v849 = vmax.f32 %v755, 0.0
        %v850 = vmax.f32 %v760, 0.0
        %v851 = vmax.f32 %v763, 0.0
        %v852 = vmax.f32 %v768, 0.0
        %v853 = vmax.f32 %v771, 0.0
        %v854 = vmax.f32 %v776, 0.0
        %v855 = vmax.f32 %v779, 0.0
        %v856 = vmax.f32 %v784, 0.0
        %v857 = vmax.f32 %v787, 0.0
        %v858 = vmax.f32 %v792, 0.0
        %v859 = vmax.f32 %v795, 0.0
        %v860 = vmax.f32 %v800, 0.0
        %v861 = vmax.f32 %v803, 0.0
        %v862 = vmax.f32 %v808, 0.0
        %v863 = vmax.f32 %v811, 0.0
        %v864 = vmax.f32 %v816, 0.0
        %v865 = vmax.f32 %v819, 0.0
        %v866 = vmax.f32 %v824, 0.0
        %v867 = vmax.f32 %v827, 0.0
        %v868 = vmax.f32 %v832, 0.0
        %v869 = vmax.f32 %v835, 0.0
        %v870 = vpack.c.bf16 %v839, %v838
        %v871 = vpack.c.bf16 %v841, %v840
        %v872 = vpack.c.bf16 %v843, %v842
        %v873 = vpack.c.bf16 %v845, %v844
        %v874 = vpack.c.bf16 %v847, %v846
        %v875 = vpack.c.bf16 %v849, %v848
        %v876 = vpack.c.bf16 %v851, %v850
        %v877 = vpack.c.bf16 %v853, %v852
        %v878 = vpack.c.bf16 %v855, %v854
        %v879 = vpack.c.bf16 %v857, %v856
        %v880 = vpack.c.bf16 %v859, %v858
        %v881 = vpack.c.bf16 %v861, %v860
        %v882 = vpack.c.bf16 %v863, %v862
        %v883 = vpack.c.bf16 %v865, %v864
        %v884 = vpack.c.bf16 %v867, %v866
        %v885 = vpack.c.bf16 %v869, %v868
        %v886 = vld [vmem:[%s3] sm:$0xf]
        %v887 = vld [vmem:[%s3 + $0x4] sm:$0xf]
        %v888 = vld [vmem:[%s3 + $0x8] sm:$0xf]
        %v889 = vld [vmem:[%s3 + $0xc] sm:$0xf]
        %v890 = vld [vmem:[%s3 + $0x10] sm:$0xf]
        %v891 = vld [vmem:[%s3 + $0x14] sm:$0xf]
        %v892 = vld [vmem:[%s3 + $0x18] sm:$0xf]
        %v893 = vld [vmem:[%s3 + $0x1c] sm:$0xf]
        %v894 = vld [vmem:[%s3 + $0x20] sm:$0xf]
        %v895 = vld [vmem:[%s3 + $0x24] sm:$0xf]
        %v896 = vld [vmem:[%s3 + $0x28] sm:$0xf]
        %v897 = vld [vmem:[%s3 + $0x2c] sm:$0xf]
        %v898 = vld [vmem:[%s3 + $0x30] sm:$0xf]
        %v899 = vld [vmem:[%s3 + $0x34] sm:$0xf]
        %v900 = vld [vmem:[%s3 + $0x38] sm:$0xf]
        %v901 = vld [vmem:[%s3 + $0x3c] sm:$0xf]
        %v902 = vld [vmem:[%s4] sm:$0x1]
        %v904 = vlaneseq
        %v905 = vshrl.u32 %v904, 7
        %v906 = vsub.s32 0, %v905
        %v907 = vrot.slane %v902, %v906
        %v925 = vunpack.c.l.b16 %v886
        %v926 = vunpack.c.l.b16 %v887
        %v927 = vunpack.c.l.b16 %v888
        %v928 = vunpack.c.l.b16 %v889
        %v929 = vunpack.c.l.b16 %v890
        %v930 = vunpack.c.l.b16 %v891
        %v931 = vunpack.c.l.b16 %v892
        %v932 = vunpack.c.l.b16 %v893
        %v933 = vunpack.c.l.b16 %v894
        %v934 = vunpack.c.l.b16 %v895
        %v935 = vunpack.c.l.b16 %v896
        %v936 = vunpack.c.l.b16 %v897
        %v937 = vunpack.c.l.b16 %v898
        %v938 = vunpack.c.l.b16 %v899
        %v939 = vunpack.c.l.b16 %v900
        %v940 = vunpack.c.l.b16 %v901
        %v941 = vpack.c.b16 %v926, %v925
        %v942 = vpack.c.b16 %v928, %v927
        %v943 = vpack.c.b16 %v930, %v929
        %v944 = vpack.c.b16 %v932, %v931
        %v945 = vpack.c.b16 %v934, %v933
        %v946 = vpack.c.b16 %v936, %v935
        %v947 = vpack.c.b16 %v938, %v937
        %v948 = vpack.c.b16 %v940, %v939
        %957 = vmatprep.subr.bf16.mxu0 0
        %958 = vmatpush1.bf16.msra.mxu0 %v941
        %959 = vmatprep.subr.bf16.mxu0 0
        %960 = vmatpush1.bf16.msra.mxu0 %v942
        %961 = vmatprep.subr.bf16.mxu0 0
        %962 = vmatpush1.bf16.msra.mxu0 %v943
        %963 = vmatprep.subr.bf16.mxu0 0
        %964 = vmatpush1.bf16.msra.mxu0 %v944
        %965 = vmatprep.subr.bf16.mxu0 0
        %966 = vmatpush1.bf16.msra.mxu0 %v945
        %967 = vmatprep.subr.bf16.mxu0 0
        %968 = vmatpush1.bf16.msra.mxu0 %v946
        %969 = vmatprep.subr.bf16.mxu0 0
        %970 = vmatpush1.bf16.msra.mxu0 %v947
        %971 = vmatprep.subr.bf16.mxu0 0
        %972 = vmatpush1.bf16.msra.mxu0 %v948
        %973 = vmatprep.subr.bf16.mxu0 0
        %974 = vmatpush1.bf16.msra.mxu0 0
        %975 = vmatprep.subr.bf16.mxu0 0
        %976 = vmatpush1.bf16.msra.mxu0 0
        %977 = vmatprep.subr.bf16.mxu0 0
        %978 = vmatpush1.bf16.msra.mxu0 0
        %979 = vmatprep.subr.bf16.mxu0 0
        %980 = vmatpush1.bf16.msra.mxu0 0
        %981 = vmatprep.subr.bf16.mxu0 0
        %982 = vmatpush1.bf16.msra.mxu0 0
        %983 = vmatprep.subr.bf16.mxu0 0
        %984 = vmatpush1.bf16.msra.mxu0 0
        %985 = vmatprep.subr.bf16.mxu0 0
        %986 = vmatpush1.bf16.msra.mxu0 0
        %987 = vmatprep.subr.bf16.mxu0 0
        %988 = vmatpush1.bf16.msra.mxu0 0
        %989 = vmatprep.mubr.bf16.mxu0 0
        %990 = vmatmul.mubr.bf16.gmra.mrb[0].mxu0 %v870
        %v991 = vpop.f32.mrb[0].mxu0
        %v992 = vadd.f32 %v907, %v991
        %v993 = vpop.f32.mrb[0].mxu0
        %v994 = vpop.f32.mrb[0].mxu0
        %v995 = vadd.f32 %v907, %v994
        %v996 = vpop.f32.mrb[0].mxu0
        %997 = vmatprep.mubr.bf16.mxu0 0
        %998 = vmatmul.mubr.bf16.gmra.mrb[0].mxu0 %v871
        %v999 = vpop.f32.mrb[0].mxu0
        %v1000 = vadd.f32 %v907, %v999
        %v1001 = vpop.f32.mrb[0].mxu0
        %v1002 = vpop.f32.mrb[0].mxu0
        %v1003 = vadd.f32 %v907, %v1002
        %v1004 = vpop.f32.mrb[0].mxu0
        %1005 = vmatprep.mubr.bf16.mxu0 0
        %1006 = vmatmul.mubr.bf16.gmra.mrb[0].mxu0 %v872
        %v1007 = vpop.f32.mrb[0].mxu0
        %v1008 = vadd.f32 %v907, %v1007
        %v1009 = vpop.f32.mrb[0].mxu0
        %v1010 = vpop.f32.mrb[0].mxu0
        %v1011 = vadd.f32 %v907, %v1010
        %v1012 = vpop.f32.mrb[0].mxu0
        %1013 = vmatprep.mubr.bf16.mxu0 0
        %1014 = vmatmul.mubr.bf16.gmra.mrb[0].mxu0 %v873
        %v1015 = vpop.f32.mrb[0].mxu0
        %v1016 = vadd.f32 %v907, %v1015
        %v1017 = vpop.f32.mrb[0].mxu0
        %v1018 = vpop.f32.mrb[0].mxu0
        %v1019 = vadd.f32 %v907, %v1018
        %v1020 = vpop.f32.mrb[0].mxu0
        %1021 = vmatprep.mubr.bf16.mxu0 0
        %1022 = vmatmul.mubr.bf16.gmra.mrb[0].mxu0 %v874
        %v1023 = vpop.f32.mrb[0].mxu0
        %v1024 = vadd.f32 %v907, %v1023
        %v1025 = vpop.f32.mrb[0].mxu0
        %v1026 = vpop.f32.mrb[0].mxu0
        %v1027 = vadd.f32 %v907, %v1026
        %v1028 = vpop.f32.mrb[0].mxu0
        %1029 = vmatprep.mubr.bf16.mxu0 0
        %1030 = vmatmul.mubr.bf16.gmra.mrb[0].mxu0 %v875
        %v1031 = vpop.f32.mrb[0].mxu0
        %v1032 = vadd.f32 %v907, %v1031
        %v1033 = vpop.f32.mrb[0].mxu0
        %v1034 = vpop.f32.mrb[0].mxu0
        %v1035 = vadd.f32 %v907, %v1034
        %v1036 = vpop.f32.mrb[0].mxu0
        %1037 = vmatprep.mubr.bf16.mxu0 0
        %1038 = vmatmul.mubr.bf16.gmra.mrb[0].mxu0 %v876
        %v1039 = vpop.f32.mrb[0].mxu0
        %v1040 = vadd.f32 %v907, %v1039
        %v1041 = vpop.f32.mrb[0].mxu0
        %v1042 = vpop.f32.mrb[0].mxu0
        %v1043 = vadd.f32 %v907, %v1042
        %v1044 = vpop.f32.mrb[0].mxu0
        %1045 = vmatprep.mubr.bf16.mxu0 0
        %1046 = vmatmul.mubr.bf16.gmra.mrb[0].mxu0 %v877
        %v1047 = vpop.f32.mrb[0].mxu0
        %v1048 = vadd.f32 %v907, %v1047
        %v1049 = vpop.f32.mrb[0].mxu0
        %v1050 = vpop.f32.mrb[0].mxu0
        %v1051 = vadd.f32 %v907, %v1050
        %v1052 = vpop.f32.mrb[0].mxu0
        %1053 = vmatprep.mubr.bf16.mxu0 0
        %1054 = vmatmul.mubr.bf16.gmra.mrb[0].mxu0 %v878
        %v1055 = vpop.f32.mrb[0].mxu0
        %v1056 = vadd.f32 %v907, %v1055
        %v1057 = vpop.f32.mrb[0].mxu0
        %v1058 = vpop.f32.mrb[0].mxu0
        %v1059 = vadd.f32 %v907, %v1058
        %v1060 = vpop.f32.mrb[0].mxu0
        %1061 = vmatprep.mubr.bf16.mxu0 0
        %1062 = vmatmul.mubr.bf16.gmra.mrb[0].mxu0 %v879
        %v1063 = vpop.f32.mrb[0].mxu0
        %v1064 = vadd.f32 %v907, %v1063
        %v1065 = vpop.f32.mrb[0].mxu0
        %v1066 = vpop.f32.mrb[0].mxu0
        %v1067 = vadd.f32 %v907, %v1066
        %v1068 = vpop.f32.mrb[0].mxu0
        %1069 = vmatprep.mubr.bf16.mxu0 0
        %1070 = vmatmul.mubr.bf16.gmra.mrb[0].mxu0 %v880
        %v1071 = vpop.f32.mrb[0].mxu0
        %v1072 = vadd.f32 %v907, %v1071
        %v1073 = vpop.f32.mrb[0].mxu0
        %v1074 = vpop.f32.mrb[0].mxu0
        %v1075 = vadd.f32 %v907, %v1074
        %v1076 = vpop.f32.mrb[0].mxu0
        %1077 = vmatprep.mubr.bf16.mxu0 0
        %1078 = vmatmul.mubr.bf16.gmra.mrb[0].mxu0 %v881
        %v1079 = vpop.f32.mrb[0].mxu0
        %v1080 = vadd.f32 %v907, %v1079
        %v1081 = vpop.f32.mrb[0].mxu0
        %v1082 = vpop.f32.mrb[0].mxu0
        %v1083 = vadd.f32 %v907, %v1082
        %v1084 = vpop.f32.mrb[0].mxu0
        %1085 = vmatprep.mubr.bf16.mxu0 0
        %1086 = vmatmul.mubr.bf16.gmra.mrb[0].mxu0 %v882
        %v1087 = vpop.f32.mrb[0].mxu0
        %v1088 = vadd.f32 %v907, %v1087
        %v1089 = vpop.f32.mrb[0].mxu0
        %v1090 = vpop.f32.mrb[0].mxu0
        %v1091 = vadd.f32 %v907, %v1090
        %v1092 = vpop.f32.mrb[0].mxu0
        %1093 = vmatprep.mubr.bf16.mxu0 0
        %1094 = vmatmul.mubr.bf16.gmra.mrb[0].mxu0 %v883
        %v1095 = vpop.f32.mrb[0].mxu0
        %v1096 = vadd.f32 %v907, %v1095
        %v1097 = vpop.f32.mrb[0].mxu0
        %v1098 = vpop.f32.mrb[0].mxu0
        %v1099 = vadd.f32 %v907, %v1098
        %v1100 = vpop.f32.mrb[0].mxu0
        %1101 = vmatprep.mubr.bf16.mxu0 0
        %1102 = vmatmul.mubr.bf16.gmra.mrb[0].mxu0 %v884
        %v1103 = vpop.f32.mrb[0].mxu0
        %v1104 = vadd.f32 %v907, %v1103
        %v1105 = vpop.f32.mrb[0].mxu0
        %v1106 = vpop.f32.mrb[0].mxu0
        %v1107 = vadd.f32 %v907, %v1106
        %v1108 = vpop.f32.mrb[0].mxu0
        %1109 = vmatprep.mubr.bf16.mxu0 0
        %1110 = vmatmul.mubr.bf16.gmra.mrb[0].mxu0 %v885
        %v1111 = vpop.f32.mrb[0].mxu0
        %v1112 = vadd.f32 %v907, %v1111
        %v1113 = vpop.f32.mrb[0].mxu0
        %v1114 = vpop.f32.mrb[0].mxu0
        %v1115 = vadd.f32 %v907, %v1114
        %v1116 = vpop.f32.mrb[0].mxu0
        %1117 = vdwg.mxu0
        %v1118 = vmax.f32 %v992, 0.0
        %v1119 = vmax.f32 %v995, 0.0
        %v1120 = vmax.f32 %v1000, 0.0
        %v1121 = vmax.f32 %v1003, 0.0
        %v1122 = vmax.f32 %v1008, 0.0
        %v1123 = vmax.f32 %v1011, 0.0
        %v1124 = vmax.f32 %v1016, 0.0
        %v1125 = vmax.f32 %v1019, 0.0
        %v1126 = vmax.f32 %v1024, 0.0
        %v1127 = vmax.f32 %v1027, 0.0
        %v1128 = vmax.f32 %v1032, 0.0
        %v1129 = vmax.f32 %v1035, 0.0
        %v1130 = vmax.f32 %v1040, 0.0
        %v1131 = vmax.f32 %v1043, 0.0
        %v1132 = vmax.f32 %v1048, 0.0
        %v1133 = vmax.f32 %v1051, 0.0
        %v1134 = vmax.f32 %v1056, 0.0
        %v1135 = vmax.f32 %v1059, 0.0
        %v1136 = vmax.f32 %v1064, 0.0
        %v1137 = vmax.f32 %v1067, 0.0
        %v1138 = vmax.f32 %v1072, 0.0
        %v1139 = vmax.f32 %v1075, 0.0
        %v1140 = vmax.f32 %v1080, 0.0
        %v1141 = vmax.f32 %v1083, 0.0
        %v1142 = vmax.f32 %v1088, 0.0
        %v1143 = vmax.f32 %v1091, 0.0
        %v1144 = vmax.f32 %v1096, 0.0
        %v1145 = vmax.f32 %v1099, 0.0
        %v1146 = vmax.f32 %v1104, 0.0
        %v1147 = vmax.f32 %v1107, 0.0
        %v1148 = vmax.f32 %v1112, 0.0
        %v1149 = vmax.f32 %v1115, 0.0
        %v1150 = vpack.c.bf16 %v1119, %v1118
        %v1151 = vpack.c.bf16 %v1121, %v1120
        %v1152 = vpack.c.bf16 %v1123, %v1122
        %v1153 = vpack.c.bf16 %v1125, %v1124
        %v1154 = vpack.c.bf16 %v1127, %v1126
        %v1155 = vpack.c.bf16 %v1129, %v1128
        %v1156 = vpack.c.bf16 %v1131, %v1130
        %v1157 = vpack.c.bf16 %v1133, %v1132
        %v1158 = vpack.c.bf16 %v1135, %v1134
        %v1159 = vpack.c.bf16 %v1137, %v1136
        %v1160 = vpack.c.bf16 %v1139, %v1138
        %v1161 = vpack.c.bf16 %v1141, %v1140
        %v1162 = vpack.c.bf16 %v1143, %v1142
        %v1163 = vpack.c.bf16 %v1145, %v1144
        %v1164 = vpack.c.bf16 %v1147, %v1146
        %v1165 = vpack.c.bf16 %v1149, %v1148
        %v1166 = vld [vmem:[%s5] sm:$0xf]
        %v1167 = vld [vmem:[%s5 + $0x4] sm:$0xf]
        %v1168 = vld [vmem:[%s5 + $0x8] sm:$0xf]
        %v1169 = vld [vmem:[%s5 + $0xc] sm:$0xf]
        %v1170 = vld [vmem:[%s5 + $0x10] sm:$0xf]
        %v1171 = vld [vmem:[%s5 + $0x14] sm:$0xf]
        %v1172 = vld [vmem:[%s5 + $0x18] sm:$0xf]
        %v1173 = vld [vmem:[%s5 + $0x1c] sm:$0xf]
        %v1174 = vld [vmem:[%s5 + $0x20] sm:$0xf]
        %v1175 = vld [vmem:[%s5 + $0x24] sm:$0xf]
        %v1176 = vld [vmem:[%s5 + $0x28] sm:$0xf]
        %v1177 = vld [vmem:[%s5 + $0x2c] sm:$0xf]
        %v1178 = vld [vmem:[%s5 + $0x30] sm:$0xf]
        %v1179 = vld [vmem:[%s5 + $0x34] sm:$0xf]
        %v1180 = vld [vmem:[%s5 + $0x38] sm:$0xf]
        %v1181 = vld [vmem:[%s5 + $0x3c] sm:$0xf]
        %v1182 = vld [vmem:[%s6] sm:$0x1]
        %v1184 = vlaneseq
        %v1185 = vshrl.u32 %v1184, 7
        %v1186 = vsub.s32 0, %v1185
        %v1187 = vrot.slane %v1182, %v1186
        %v1205 = vunpack.c.l.b16 %v1166
        %v1206 = vunpack.c.l.b16 %v1167
        %v1207 = vunpack.c.l.b16 %v1168
        %v1208 = vunpack.c.l.b16 %v1169
        %v1209 = vunpack.c.l.b16 %v1170
        %v1210 = vunpack.c.l.b16 %v1171
        %v1211 = vunpack.c.l.b16 %v1172
        %v1212 = vunpack.c.l.b16 %v1173
        %v1213 = vunpack.c.l.b16 %v1174
        %v1214 = vunpack.c.l.b16 %v1175
        %v1215 = vunpack.c.l.b16 %v1176
        %v1216 = vunpack.c.l.b16 %v1177
        %v1217 = vunpack.c.l.b16 %v1178
        %v1218 = vunpack.c.l.b16 %v1179
        %v1219 = vunpack.c.l.b16 %v1180
        %v1220 = vunpack.c.l.b16 %v1181
        %v1221 = vpack.c.b16 %v1206, %v1205
        %v1222 = vpack.c.b16 %v1208, %v1207
        %v1223 = vpack.c.b16 %v1210, %v1209
        %v1224 = vpack.c.b16 %v1212, %v1211
        %v1225 = vpack.c.b16 %v1214, %v1213
        %v1226 = vpack.c.b16 %v1216, %v1215
        %v1227 = vpack.c.b16 %v1218, %v1217
        %v1228 = vpack.c.b16 %v1220, %v1219
        %1237 = vmatprep.subr.bf16.mxu0 0
        %1238 = vmatpush1.bf16.msra.mxu0 %v1221
        %1239 = vmatprep.subr.bf16.mxu0 0
        %1240 = vmatpush1.bf16.msra.mxu0 %v1222
        %1241 = vmatprep.subr.bf16.mxu0 0
        %1242 = vmatpush1.bf16.msra.mxu0 %v1223
        %1243 = vmatprep.subr.bf16.mxu0 0
        %1244 = vmatpush1.bf16.msra.mxu0 %v1224
        %1245 = vmatprep.subr.bf16.mxu0 0
        %1246 = vmatpush1.bf16.msra.mxu0 %v1225
        %1247 = vmatprep.subr.bf16.mxu0 0
        %1248 = vmatpush1.bf16.msra.mxu0 %v1226
        %1249 = vmatprep.subr.bf16.mxu0 0
        %1250 = vmatpush1.bf16.msra.mxu0 %v1227
        %1251 = vmatprep.subr.bf16.mxu0 0
        %1252 = vmatpush1.bf16.msra.mxu0 %v1228
        %1253 = vmatprep.subr.bf16.mxu0 0
        %1254 = vmatpush1.bf16.msra.mxu0 0
        %1255 = vmatprep.subr.bf16.mxu0 0
        %1256 = vmatpush1.bf16.msra.mxu0 0
        %1257 = vmatprep.subr.bf16.mxu0 0
        %1258 = vmatpush1.bf16.msra.mxu0 0
        %1259 = vmatprep.subr.bf16.mxu0 0
        %1260 = vmatpush1.bf16.msra.mxu0 0
        %1261 = vmatprep.subr.bf16.mxu0 0
        %1262 = vmatpush1.bf16.msra.mxu0 0
        %1263 = vmatprep.subr.bf16.mxu0 0
        %1264 = vmatpush1.bf16.msra.mxu0 0
        %1265 = vmatprep.subr.bf16.mxu0 0
        %1266 = vmatpush1.bf16.msra.mxu0 0
        %1267 = vmatprep.subr.bf16.mxu0 0
        %1268 = vmatpush1.bf16.msra.mxu0 0
        %1269 = vmatprep.mubr.bf16.mxu0 0
        %1270 = vmatmul.mubr.bf16.gmra.mrb[0].mxu0 %v1150
        %v1271 = vpop.f32.mrb[0].mxu0
        %v1272 = vadd.f32 %v1187, %v1271
        %v1273 = vpop.f32.mrb[0].mxu0
        %v1274 = vpop.f32.mrb[0].mxu0
        %v1275 = vadd.f32 %v1187, %v1274
        %v1276 = vpop.f32.mrb[0].mxu0
        %1277 = vmatprep.mubr.bf16.mxu0 0
        %1278 = vmatmul.mubr.bf16.gmra.mrb[0].mxu0 %v1151
        %v1279 = vpop.f32.mrb[0].mxu0
        %v1280 = vadd.f32 %v1187, %v1279
        %v1281 = vpop.f32.mrb[0].mxu0
        %v1282 = vpop.f32.mrb[0].mxu0
        %v1283 = vadd.f32 %v1187, %v1282
        %v1284 = vpop.f32.mrb[0].mxu0
        %1285 = vmatprep.mubr.bf16.mxu0 0
        %1286 = vmatmul.mubr.bf16.gmra.mrb[0].mxu0 %v1152
        %v1287 = vpop.f32.mrb[0].mxu0
        %v1288 = vadd.f32 %v1187, %v1287
        %v1289 = vpop.f32.mrb[0].mxu0
        %v1290 = vpop.f32.mrb[0].mxu0
        %v1291 = vadd.f32 %v1187, %v1290
        %v1292 = vpop.f32.mrb[0].mxu0
        %1293 = vmatprep.mubr.bf16.mxu0 0
        %1294 = vmatmul.mubr.bf16.gmra.mrb[0].mxu0 %v1153
        %v1295 = vpop.f32.mrb[0].mxu0
        %v1296 = vadd.f32 %v1187, %v1295
        %v1297 = vpop.f32.mrb[0].mxu0
        %v1298 = vpop.f32.mrb[0].mxu0
        %v1299 = vadd.f32 %v1187, %v1298
        %v1300 = vpop.f32.mrb[0].mxu0
        %1301 = vmatprep.mubr.bf16.mxu0 0
        %1302 = vmatmul.mubr.bf16.gmra.mrb[0].mxu0 %v1154
        %v1303 = vpop.f32.mrb[0].mxu0
        %v1304 = vadd.f32 %v1187, %v1303
        %v1305 = vpop.f32.mrb[0].mxu0
        %v1306 = vpop.f32.mrb[0].mxu0
        %v1307 = vadd.f32 %v1187, %v1306
        %v1308 = vpop.f32.mrb[0].mxu0
        %1309 = vmatprep.mubr.bf16.mxu0 0
        %1310 = vmatmul.mubr.bf16.gmra.mrb[0].mxu0 %v1155
        %v1311 = vpop.f32.mrb[0].mxu0
        %v1312 = vadd.f32 %v1187, %v1311
        %v1313 = vpop.f32.mrb[0].mxu0
        %v1314 = vpop.f32.mrb[0].mxu0
        %v1315 = vadd.f32 %v1187, %v1314
        %v1316 = vpop.f32.mrb[0].mxu0
        %1317 = vmatprep.mubr.bf16.mxu0 0
        %1318 = vmatmul.mubr.bf16.gmra.mrb[0].mxu0 %v1156
        %v1319 = vpop.f32.mrb[0].mxu0
        %v1320 = vadd.f32 %v1187, %v1319
        %v1321 = vpop.f32.mrb[0].mxu0
        %v1322 = vpop.f32.mrb[0].mxu0
        %v1323 = vadd.f32 %v1187, %v1322
        %v1324 = vpop.f32.mrb[0].mxu0
        %1325 = vmatprep.mubr.bf16.mxu0 0
        %1326 = vmatmul.mubr.bf16.gmra.mrb[0].mxu0 %v1157
        %v1327 = vpop.f32.mrb[0].mxu0
        %v1328 = vadd.f32 %v1187, %v1327
        %v1329 = vpop.f32.mrb[0].mxu0
        %v1330 = vpop.f32.mrb[0].mxu0
        %v1331 = vadd.f32 %v1187, %v1330
        %v1332 = vpop.f32.mrb[0].mxu0
        %1333 = vmatprep.mubr.bf16.mxu0 0
        %1334 = vmatmul.mubr.bf16.gmra.mrb[0].mxu0 %v1158
        %v1335 = vpop.f32.mrb[0].mxu0
        %v1336 = vadd.f32 %v1187, %v1335
        %v1337 = vpop.f32.mrb[0].mxu0
        %v1338 = vpop.f32.mrb[0].mxu0
        %v1339 = vadd.f32 %v1187, %v1338
        %v1340 = vpop.f32.mrb[0].mxu0
        %1341 = vmatprep.mubr.bf16.mxu0 0
        %1342 = vmatmul.mubr.bf16.gmra.mrb[0].mxu0 %v1159
        %v1343 = vpop.f32.mrb[0].mxu0
        %v1344 = vadd.f32 %v1187, %v1343
        %v1345 = vpop.f32.mrb[0].mxu0
        %v1346 = vpop.f32.mrb[0].mxu0
        %v1347 = vadd.f32 %v1187, %v1346
        %v1348 = vpop.f32.mrb[0].mxu0
        %1349 = vmatprep.mubr.bf16.mxu0 0
        %1350 = vmatmul.mubr.bf16.gmra.mrb[0].mxu0 %v1160
        %v1351 = vpop.f32.mrb[0].mxu0
        %v1352 = vadd.f32 %v1187, %v1351
        %v1353 = vpop.f32.mrb[0].mxu0
        %v1354 = vpop.f32.mrb[0].mxu0
        %v1355 = vadd.f32 %v1187, %v1354
        %v1356 = vpop.f32.mrb[0].mxu0
        %1357 = vmatprep.mubr.bf16.mxu0 0
        %1358 = vmatmul.mubr.bf16.gmra.mrb[0].mxu0 %v1161
        %v1359 = vpop.f32.mrb[0].mxu0
        %v1360 = vadd.f32 %v1187, %v1359
        %v1361 = vpop.f32.mrb[0].mxu0
        %v1362 = vpop.f32.mrb[0].mxu0
        %v1363 = vadd.f32 %v1187, %v1362
        %v1364 = vpop.f32.mrb[0].mxu0
        %1365 = vmatprep.mubr.bf16.mxu0 0
        %1366 = vmatmul.mubr.bf16.gmra.mrb[0].mxu0 %v1162
        %v1367 = vpop.f32.mrb[0].mxu0
        %v1368 = vadd.f32 %v1187, %v1367
        %v1369 = vpop.f32.mrb[0].mxu0
        %v1370 = vpop.f32.mrb[0].mxu0
        %v1371 = vadd.f32 %v1187, %v1370
        %v1372 = vpop.f32.mrb[0].mxu0
        %1373 = vmatprep.mubr.bf16.mxu0 0
        %1374 = vmatmul.mubr.bf16.gmra.mrb[0].mxu0 %v1163
        %v1375 = vpop.f32.mrb[0].mxu0
        %v1376 = vadd.f32 %v1187, %v1375
        %v1377 = vpop.f32.mrb[0].mxu0
        %v1378 = vpop.f32.mrb[0].mxu0
        %v1379 = vadd.f32 %v1187, %v1378
        %v1380 = vpop.f32.mrb[0].mxu0
        %1381 = vmatprep.mubr.bf16.mxu0 0
        %1382 = vmatmul.mubr.bf16.gmra.mrb[0].mxu0 %v1164
        %v1383 = vpop.f32.mrb[0].mxu0
        %v1384 = vadd.f32 %v1187, %v1383
        %v1385 = vpop.f32.mrb[0].mxu0
        %v1386 = vpop.f32.mrb[0].mxu0
        %v1387 = vadd.f32 %v1187, %v1386
        %v1388 = vpop.f32.mrb[0].mxu0
        %1389 = vmatprep.mubr.bf16.mxu0 0
        %1390 = vmatmul.mubr.bf16.gmra.mrb[0].mxu0 %v1165
        %v1391 = vpop.f32.mrb[0].mxu0
        %v1392 = vadd.f32 %v1187, %v1391
        %v1393 = vpop.f32.mrb[0].mxu0
        %v1394 = vpop.f32.mrb[0].mxu0
        %v1395 = vadd.f32 %v1187, %v1394
        %v1396 = vpop.f32.mrb[0].mxu0
        %1397 = vdwg.mxu0
        %v1398 = vmax.f32 %v1272, 0.0
        %v1399 = vmax.f32 %v1275, 0.0
        %v1400 = vmax.f32 %v1280, 0.0
        %v1401 = vmax.f32 %v1283, 0.0
        %v1402 = vmax.f32 %v1288, 0.0
        %v1403 = vmax.f32 %v1291, 0.0
        %v1404 = vmax.f32 %v1296, 0.0
        %v1405 = vmax.f32 %v1299, 0.0
        %v1406 = vmax.f32 %v1304, 0.0
        %v1407 = vmax.f32 %v1307, 0.0
        %v1408 = vmax.f32 %v1312, 0.0
        %v1409 = vmax.f32 %v1315, 0.0
        %v1410 = vmax.f32 %v1320, 0.0
        %v1411 = vmax.f32 %v1323, 0.0
        %v1412 = vmax.f32 %v1328, 0.0
        %v1413 = vmax.f32 %v1331, 0.0
        %v1414 = vmax.f32 %v1336, 0.0
        %v1415 = vmax.f32 %v1339, 0.0
        %v1416 = vmax.f32 %v1344, 0.0
        %v1417 = vmax.f32 %v1347, 0.0
        %v1418 = vmax.f32 %v1352, 0.0
        %v1419 = vmax.f32 %v1355, 0.0
        %v1420 = vmax.f32 %v1360, 0.0
        %v1421 = vmax.f32 %v1363, 0.0
        %v1422 = vmax.f32 %v1368, 0.0
        %v1423 = vmax.f32 %v1371, 0.0
        %v1424 = vmax.f32 %v1376, 0.0
        %v1425 = vmax.f32 %v1379, 0.0
        %v1426 = vmax.f32 %v1384, 0.0
        %v1427 = vmax.f32 %v1387, 0.0
        %v1428 = vmax.f32 %v1392, 0.0
        %v1429 = vmax.f32 %v1395, 0.0
        %v1430 = vpack.c.bf16 %v1399, %v1398
        %v1431 = vpack.c.bf16 %v1401, %v1400
        %v1432 = vpack.c.bf16 %v1403, %v1402
        %v1433 = vpack.c.bf16 %v1405, %v1404
        %v1434 = vpack.c.bf16 %v1407, %v1406
        %v1435 = vpack.c.bf16 %v1409, %v1408
        %v1436 = vpack.c.bf16 %v1411, %v1410
        %v1437 = vpack.c.bf16 %v1413, %v1412
        %v1438 = vpack.c.bf16 %v1415, %v1414
        %v1439 = vpack.c.bf16 %v1417, %v1416
        %v1440 = vpack.c.bf16 %v1419, %v1418
        %v1441 = vpack.c.bf16 %v1421, %v1420
        %v1442 = vpack.c.bf16 %v1423, %v1422
        %v1443 = vpack.c.bf16 %v1425, %v1424
        %v1444 = vpack.c.bf16 %v1427, %v1426
        %v1445 = vpack.c.bf16 %v1429, %v1428
        %v1446 = vld [vmem:[%s7] sm:$0xf]
        %v1447 = vld [vmem:[%s7 + $0x4] sm:$0xf]
        %v1448 = vld [vmem:[%s7 + $0x8] sm:$0xf]
        %v1449 = vld [vmem:[%s7 + $0xc] sm:$0xf]
        %v1450 = vld [vmem:[%s7 + $0x10] sm:$0xf]
        %v1451 = vld [vmem:[%s7 + $0x14] sm:$0xf]
        %v1452 = vld [vmem:[%s7 + $0x18] sm:$0xf]
        %v1453 = vld [vmem:[%s7 + $0x1c] sm:$0xf]
        %v1454 = vld [vmem:[%s7 + $0x20] sm:$0xf]
        %v1455 = vld [vmem:[%s7 + $0x24] sm:$0xf]
        %v1456 = vld [vmem:[%s7 + $0x28] sm:$0xf]
        %v1457 = vld [vmem:[%s7 + $0x2c] sm:$0xf]
        %v1458 = vld [vmem:[%s7 + $0x30] sm:$0xf]
        %v1459 = vld [vmem:[%s7 + $0x34] sm:$0xf]
        %v1460 = vld [vmem:[%s7 + $0x38] sm:$0xf]
        %v1461 = vld [vmem:[%s7 + $0x3c] sm:$0xf]
        %v1462 = vld [vmem:[%s8] sm:$0x1]
        %v1464 = vlaneseq
        %v1465 = vshrl.u32 %v1464, 7
        %v1466 = vsub.s32 0, %v1465
        %v1467 = vrot.slane %v1462, %v1466
        %v1485 = vunpack.c.l.b16 %v1446
        %v1486 = vunpack.c.l.b16 %v1447
        %v1487 = vunpack.c.l.b16 %v1448
        %v1488 = vunpack.c.l.b16 %v1449
        %v1489 = vunpack.c.l.b16 %v1450
        %v1490 = vunpack.c.l.b16 %v1451
        %v1491 = vunpack.c.l.b16 %v1452
        %v1492 = vunpack.c.l.b16 %v1453
        %v1493 = vunpack.c.l.b16 %v1454
        %v1494 = vunpack.c.l.b16 %v1455
        %v1495 = vunpack.c.l.b16 %v1456
        %v1496 = vunpack.c.l.b16 %v1457
        %v1497 = vunpack.c.l.b16 %v1458
        %v1498 = vunpack.c.l.b16 %v1459
        %v1499 = vunpack.c.l.b16 %v1460
        %v1500 = vunpack.c.l.b16 %v1461
        %v1501 = vpack.c.b16 %v1486, %v1485
        %v1502 = vpack.c.b16 %v1488, %v1487
        %v1503 = vpack.c.b16 %v1490, %v1489
        %v1504 = vpack.c.b16 %v1492, %v1491
        %v1505 = vpack.c.b16 %v1494, %v1493
        %v1506 = vpack.c.b16 %v1496, %v1495
        %v1507 = vpack.c.b16 %v1498, %v1497
        %v1508 = vpack.c.b16 %v1500, %v1499
        %1517 = vmatprep.subr.bf16.mxu0 0
        %1518 = vmatpush1.bf16.msra.mxu0 %v1501
        %1519 = vmatprep.subr.bf16.mxu0 0
        %1520 = vmatpush1.bf16.msra.mxu0 %v1502
        %1521 = vmatprep.subr.bf16.mxu0 0
        %1522 = vmatpush1.bf16.msra.mxu0 %v1503
        %1523 = vmatprep.subr.bf16.mxu0 0
        %1524 = vmatpush1.bf16.msra.mxu0 %v1504
        %1525 = vmatprep.subr.bf16.mxu0 0
        %1526 = vmatpush1.bf16.msra.mxu0 %v1505
        %1527 = vmatprep.subr.bf16.mxu0 0
        %1528 = vmatpush1.bf16.msra.mxu0 %v1506
        %1529 = vmatprep.subr.bf16.mxu0 0
        %1530 = vmatpush1.bf16.msra.mxu0 %v1507
        %1531 = vmatprep.subr.bf16.mxu0 0
        %1532 = vmatpush1.bf16.msra.mxu0 %v1508
        %1533 = vmatprep.subr.bf16.mxu0 0
        %1534 = vmatpush1.bf16.msra.mxu0 0
        %1535 = vmatprep.subr.bf16.mxu0 0
        %1536 = vmatpush1.bf16.msra.mxu0 0
        %1537 = vmatprep.subr.bf16.mxu0 0
        %1538 = vmatpush1.bf16.msra.mxu0 0
        %1539 = vmatprep.subr.bf16.mxu0 0
        %1540 = vmatpush1.bf16.msra.mxu0 0
        %1541 = vmatprep.subr.bf16.mxu0 0
        %1542 = vmatpush1.bf16.msra.mxu0 0
        %1543 = vmatprep.subr.bf16.mxu0 0
        %1544 = vmatpush1.bf16.msra.mxu0 0
        %1545 = vmatprep.subr.bf16.mxu0 0
        %1546 = vmatpush1.bf16.msra.mxu0 0
        %1547 = vmatprep.subr.bf16.mxu0 0
        %1548 = vmatpush1.bf16.msra.mxu0 0
        %1549 = vmatprep.mubr.bf16.mxu0 0
        %1550 = vmatmul.mubr.bf16.gmra.mrb[0].mxu0 %v1430
        %v1551 = vpop.f32.mrb[0].mxu0
        %v1552 = vadd.f32 %v1467, %v1551
        %v1553 = vpop.f32.mrb[0].mxu0
        %v1554 = vpop.f32.mrb[0].mxu0
        %v1555 = vadd.f32 %v1467, %v1554
        %v1556 = vpop.f32.mrb[0].mxu0
        %1557 = vmatprep.mubr.bf16.mxu0 0
        %1558 = vmatmul.mubr.bf16.gmra.mrb[0].mxu0 %v1431
        %v1559 = vpop.f32.mrb[0].mxu0
        %v1560 = vadd.f32 %v1467, %v1559
        %v1561 = vpop.f32.mrb[0].mxu0
        %v1562 = vpop.f32.mrb[0].mxu0
        %v1563 = vadd.f32 %v1467, %v1562
        %v1564 = vpop.f32.mrb[0].mxu0
        %1565 = vmatprep.mubr.bf16.mxu0 0
        %1566 = vmatmul.mubr.bf16.gmra.mrb[0].mxu0 %v1432
        %v1567 = vpop.f32.mrb[0].mxu0
        %v1568 = vadd.f32 %v1467, %v1567
        %v1569 = vpop.f32.mrb[0].mxu0
        %v1570 = vpop.f32.mrb[0].mxu0
        %v1571 = vadd.f32 %v1467, %v1570
        %v1572 = vpop.f32.mrb[0].mxu0
        %1573 = vmatprep.mubr.bf16.mxu0 0
        %1574 = vmatmul.mubr.bf16.gmra.mrb[0].mxu0 %v1433
        %v1575 = vpop.f32.mrb[0].mxu0
        %v1576 = vadd.f32 %v1467, %v1575
        %v1577 = vpop.f32.mrb[0].mxu0
        %v1578 = vpop.f32.mrb[0].mxu0
        %v1579 = vadd.f32 %v1467, %v1578
        %v1580 = vpop.f32.mrb[0].mxu0
        %1581 = vmatprep.mubr.bf16.mxu0 0
        %1582 = vmatmul.mubr.bf16.gmra.mrb[0].mxu0 %v1434
        %v1583 = vpop.f32.mrb[0].mxu0
        %v1584 = vadd.f32 %v1467, %v1583
        %v1585 = vpop.f32.mrb[0].mxu0
        %v1586 = vpop.f32.mrb[0].mxu0
        %v1587 = vadd.f32 %v1467, %v1586
        %v1588 = vpop.f32.mrb[0].mxu0
        %1589 = vmatprep.mubr.bf16.mxu0 0
        %1590 = vmatmul.mubr.bf16.gmra.mrb[0].mxu0 %v1435
        %v1591 = vpop.f32.mrb[0].mxu0
        %v1592 = vadd.f32 %v1467, %v1591
        %v1593 = vpop.f32.mrb[0].mxu0
        %v1594 = vpop.f32.mrb[0].mxu0
        %v1595 = vadd.f32 %v1467, %v1594
        %v1596 = vpop.f32.mrb[0].mxu0
        %1597 = vmatprep.mubr.bf16.mxu0 0
        %1598 = vmatmul.mubr.bf16.gmra.mrb[0].mxu0 %v1436
        %v1599 = vpop.f32.mrb[0].mxu0
        %v1600 = vadd.f32 %v1467, %v1599
        %v1601 = vpop.f32.mrb[0].mxu0
        %v1602 = vpop.f32.mrb[0].mxu0
        %v1603 = vadd.f32 %v1467, %v1602
        %v1604 = vpop.f32.mrb[0].mxu0
        %1605 = vmatprep.mubr.bf16.mxu0 0
        %1606 = vmatmul.mubr.bf16.gmra.mrb[0].mxu0 %v1437
        %v1607 = vpop.f32.mrb[0].mxu0
        %v1608 = vadd.f32 %v1467, %v1607
        %v1609 = vpop.f32.mrb[0].mxu0
        %v1610 = vpop.f32.mrb[0].mxu0
        %v1611 = vadd.f32 %v1467, %v1610
        %v1612 = vpop.f32.mrb[0].mxu0
        %1613 = vmatprep.mubr.bf16.mxu0 0
        %1614 = vmatmul.mubr.bf16.gmra.mrb[0].mxu0 %v1438
        %v1615 = vpop.f32.mrb[0].mxu0
        %v1616 = vadd.f32 %v1467, %v1615
        %v1617 = vpop.f32.mrb[0].mxu0
        %v1618 = vpop.f32.mrb[0].mxu0
        %v1619 = vadd.f32 %v1467, %v1618
        %v1620 = vpop.f32.mrb[0].mxu0
        %1621 = vmatprep.mubr.bf16.mxu0 0
        %1622 = vmatmul.mubr.bf16.gmra.mrb[0].mxu0 %v1439
        %v1623 = vpop.f32.mrb[0].mxu0
        %v1624 = vadd.f32 %v1467, %v1623
        %v1625 = vpop.f32.mrb[0].mxu0
        %v1626 = vpop.f32.mrb[0].mxu0
        %v1627 = vadd.f32 %v1467, %v1626
        %v1628 = vpop.f32.mrb[0].mxu0
        %1629 = vmatprep.mubr.bf16.mxu0 0
        %1630 = vmatmul.mubr.bf16.gmra.mrb[0].mxu0 %v1440
        %v1631 = vpop.f32.mrb[0].mxu0
        %v1632 = vadd.f32 %v1467, %v1631
        %v1633 = vpop.f32.mrb[0].mxu0
        %v1634 = vpop.f32.mrb[0].mxu0
        %v1635 = vadd.f32 %v1467, %v1634
        %v1636 = vpop.f32.mrb[0].mxu0
        %1637 = vmatprep.mubr.bf16.mxu0 0
        %1638 = vmatmul.mubr.bf16.gmra.mrb[0].mxu0 %v1441
        %v1639 = vpop.f32.mrb[0].mxu0
        %v1640 = vadd.f32 %v1467, %v1639
        %v1641 = vpop.f32.mrb[0].mxu0
        %v1642 = vpop.f32.mrb[0].mxu0
        %v1643 = vadd.f32 %v1467, %v1642
        %v1644 = vpop.f32.mrb[0].mxu0
        %1645 = vmatprep.mubr.bf16.mxu0 0
        %1646 = vmatmul.mubr.bf16.gmra.mrb[0].mxu0 %v1442
        %v1647 = vpop.f32.mrb[0].mxu0
        %v1648 = vadd.f32 %v1467, %v1647
        %v1649 = vpop.f32.mrb[0].mxu0
        %v1650 = vpop.f32.mrb[0].mxu0
        %v1651 = vadd.f32 %v1467, %v1650
        %v1652 = vpop.f32.mrb[0].mxu0
        %1653 = vmatprep.mubr.bf16.mxu0 0
        %1654 = vmatmul.mubr.bf16.gmra.mrb[0].mxu0 %v1443
        %v1655 = vpop.f32.mrb[0].mxu0
        %v1656 = vadd.f32 %v1467, %v1655
        %v1657 = vpop.f32.mrb[0].mxu0
        %v1658 = vpop.f32.mrb[0].mxu0
        %v1659 = vadd.f32 %v1467, %v1658
        %v1660 = vpop.f32.mrb[0].mxu0
        %1661 = vmatprep.mubr.bf16.mxu0 0
        %1662 = vmatmul.mubr.bf16.gmra.mrb[0].mxu0 %v1444
        %v1663 = vpop.f32.mrb[0].mxu0
        %v1664 = vadd.f32 %v1467, %v1663
        %v1665 = vpop.f32.mrb[0].mxu0
        %v1666 = vpop.f32.mrb[0].mxu0
        %v1667 = vadd.f32 %v1467, %v1666
        %v1668 = vpop.f32.mrb[0].mxu0
        %1669 = vmatprep.mubr.bf16.mxu0 0
        %1670 = vmatmul.mubr.bf16.gmra.mrb[0].mxu0 %v1445
        %v1671 = vpop.f32.mrb[0].mxu0
        %v1672 = vadd.f32 %v1467, %v1671
        %v1673 = vpop.f32.mrb[0].mxu0
        %v1674 = vpop.f32.mrb[0].mxu0
        %v1675 = vadd.f32 %v1467, %v1674
        %v1676 = vpop.f32.mrb[0].mxu0
        %1677 = vdwg.mxu0
        %v1678 = vmax.f32 %v1552, 0.0
        %v1679 = vmax.f32 %v1555, 0.0
        %v1680 = vmax.f32 %v1560, 0.0
        %v1681 = vmax.f32 %v1563, 0.0
        %v1682 = vmax.f32 %v1568, 0.0
        %v1683 = vmax.f32 %v1571, 0.0
        %v1684 = vmax.f32 %v1576, 0.0
        %v1685 = vmax.f32 %v1579, 0.0
        %v1686 = vmax.f32 %v1584, 0.0
        %v1687 = vmax.f32 %v1587, 0.0
        %v1688 = vmax.f32 %v1592, 0.0
        %v1689 = vmax.f32 %v1595, 0.0
        %v1690 = vmax.f32 %v1600, 0.0
        %v1691 = vmax.f32 %v1603, 0.0
        %v1692 = vmax.f32 %v1608, 0.0
        %v1693 = vmax.f32 %v1611, 0.0
        %v1694 = vmax.f32 %v1616, 0.0
        %v1695 = vmax.f32 %v1619, 0.0
        %v1696 = vmax.f32 %v1624, 0.0
        %v1697 = vmax.f32 %v1627, 0.0
        %v1698 = vmax.f32 %v1632, 0.0
        %v1699 = vmax.f32 %v1635, 0.0
        %v1700 = vmax.f32 %v1640, 0.0
        %v1701 = vmax.f32 %v1643, 0.0
        %v1702 = vmax.f32 %v1648, 0.0
        %v1703 = vmax.f32 %v1651, 0.0
        %v1704 = vmax.f32 %v1656, 0.0
        %v1705 = vmax.f32 %v1659, 0.0
        %v1706 = vmax.f32 %v1664, 0.0
        %v1707 = vmax.f32 %v1667, 0.0
        %v1708 = vmax.f32 %v1672, 0.0
        %v1709 = vmax.f32 %v1675, 0.0
        %v1710 = vpack.c.bf16 %v1679, %v1678
        %v1711 = vpack.c.bf16 %v1681, %v1680
        %v1712 = vpack.c.bf16 %v1683, %v1682
        %v1713 = vpack.c.bf16 %v1685, %v1684
        %v1714 = vpack.c.bf16 %v1687, %v1686
        %v1715 = vpack.c.bf16 %v1689, %v1688
        %v1716 = vpack.c.bf16 %v1691, %v1690
        %v1717 = vpack.c.bf16 %v1693, %v1692
        %v1718 = vpack.c.bf16 %v1695, %v1694
        %v1719 = vpack.c.bf16 %v1697, %v1696
        %v1720 = vpack.c.bf16 %v1699, %v1698
        %v1721 = vpack.c.bf16 %v1701, %v1700
        %v1722 = vpack.c.bf16 %v1703, %v1702
        %v1723 = vpack.c.bf16 %v1705, %v1704
        %v1724 = vpack.c.bf16 %v1707, %v1706
        %v1725 = vpack.c.bf16 %v1709, %v1708
        %v1726 = vld [vmem:[%s9] sm:$0xf]
        %v1727 = vld [vmem:[%s9 + $0x4] sm:$0xf]
        %v1728 = vld [vmem:[%s9 + $0x8] sm:$0xf]
        %v1729 = vld [vmem:[%s9 + $0xc] sm:$0xf]
        %v1730 = vld [vmem:[%s9 + $0x10] sm:$0xf]
        %v1731 = vld [vmem:[%s9 + $0x14] sm:$0xf]
        %v1732 = vld [vmem:[%s9 + $0x18] sm:$0xf]
        %v1733 = vld [vmem:[%s9 + $0x1c] sm:$0xf]
        %v1734 = vld [vmem:[%s9 + $0x20] sm:$0xf]
        %v1735 = vld [vmem:[%s9 + $0x24] sm:$0xf]
        %v1736 = vld [vmem:[%s9 + $0x28] sm:$0xf]
        %v1737 = vld [vmem:[%s9 + $0x2c] sm:$0xf]
        %v1738 = vld [vmem:[%s9 + $0x30] sm:$0xf]
        %v1739 = vld [vmem:[%s9 + $0x34] sm:$0xf]
        %v1740 = vld [vmem:[%s9 + $0x38] sm:$0xf]
        %v1741 = vld [vmem:[%s9 + $0x3c] sm:$0xf]
        %v1742 = vld [vmem:[%s10] sm:$0x1]
        %v1744 = vlaneseq
        %v1745 = vshrl.u32 %v1744, 7
        %v1746 = vsub.s32 0, %v1745
        %v1747 = vrot.slane %v1742, %v1746
        %v1765 = vunpack.c.l.b16 %v1726
        %v1766 = vunpack.c.l.b16 %v1727
        %v1767 = vunpack.c.l.b16 %v1728
        %v1768 = vunpack.c.l.b16 %v1729
        %v1769 = vunpack.c.l.b16 %v1730
        %v1770 = vunpack.c.l.b16 %v1731
        %v1771 = vunpack.c.l.b16 %v1732
        %v1772 = vunpack.c.l.b16 %v1733
        %v1773 = vunpack.c.l.b16 %v1734
        %v1774 = vunpack.c.l.b16 %v1735
        %v1775 = vunpack.c.l.b16 %v1736
        %v1776 = vunpack.c.l.b16 %v1737
        %v1777 = vunpack.c.l.b16 %v1738
        %v1778 = vunpack.c.l.b16 %v1739
        %v1779 = vunpack.c.l.b16 %v1740
        %v1780 = vunpack.c.l.b16 %v1741
        %v1781 = vpack.c.b16 %v1766, %v1765
        %v1782 = vpack.c.b16 %v1768, %v1767
        %v1783 = vpack.c.b16 %v1770, %v1769
        %v1784 = vpack.c.b16 %v1772, %v1771
        %v1785 = vpack.c.b16 %v1774, %v1773
        %v1786 = vpack.c.b16 %v1776, %v1775
        %v1787 = vpack.c.b16 %v1778, %v1777
        %v1788 = vpack.c.b16 %v1780, %v1779
        %1797 = vmatprep.subr.bf16.mxu0 0
        %1798 = vmatpush1.bf16.msra.mxu0 %v1781
        %1799 = vmatprep.subr.bf16.mxu0 0
        %1800 = vmatpush1.bf16.msra.mxu0 %v1782
        %1801 = vmatprep.subr.bf16.mxu0 0
        %1802 = vmatpush1.bf16.msra.mxu0 %v1783
        %1803 = vmatprep.subr.bf16.mxu0 0
        %1804 = vmatpush1.bf16.msra.mxu0 %v1784
        %1805 = vmatprep.subr.bf16.mxu0 0
        %1806 = vmatpush1.bf16.msra.mxu0 %v1785
        %1807 = vmatprep.subr.bf16.mxu0 0
        %1808 = vmatpush1.bf16.msra.mxu0 %v1786
        %1809 = vmatprep.subr.bf16.mxu0 0
        %1810 = vmatpush1.bf16.msra.mxu0 %v1787
        %1811 = vmatprep.subr.bf16.mxu0 0
        %1812 = vmatpush1.bf16.msra.mxu0 %v1788
        %1813 = vmatprep.subr.bf16.mxu0 0
        %1814 = vmatpush1.bf16.msra.mxu0 0
        %1815 = vmatprep.subr.bf16.mxu0 0
        %1816 = vmatpush1.bf16.msra.mxu0 0
        %1817 = vmatprep.subr.bf16.mxu0 0
        %1818 = vmatpush1.bf16.msra.mxu0 0
        %1819 = vmatprep.subr.bf16.mxu0 0
        %1820 = vmatpush1.bf16.msra.mxu0 0
        %1821 = vmatprep.subr.bf16.mxu0 0
        %1822 = vmatpush1.bf16.msra.mxu0 0
        %1823 = vmatprep.subr.bf16.mxu0 0
        %1824 = vmatpush1.bf16.msra.mxu0 0
        %1825 = vmatprep.subr.bf16.mxu0 0
        %1826 = vmatpush1.bf16.msra.mxu0 0
        %1827 = vmatprep.subr.bf16.mxu0 0
        %1828 = vmatpush1.bf16.msra.mxu0 0
        %1829 = vmatprep.mubr.bf16.mxu0 0
        %1830 = vmatmul.mubr.bf16.gmra.mrb[0].mxu0 %v1710
        %v1831 = vpop.f32.mrb[0].mxu0
        %v1832 = vadd.f32 %v1747, %v1831
        %v1833 = vpop.f32.mrb[0].mxu0
        %v1834 = vpop.f32.mrb[0].mxu0
        %v1835 = vadd.f32 %v1747, %v1834
        %v1836 = vpop.f32.mrb[0].mxu0
        %1837 = vmatprep.mubr.bf16.mxu0 0
        %1838 = vmatmul.mubr.bf16.gmra.mrb[0].mxu0 %v1711
        %v1839 = vpop.f32.mrb[0].mxu0
        %v1840 = vadd.f32 %v1747, %v1839
        %v1841 = vpop.f32.mrb[0].mxu0
        %v1842 = vpop.f32.mrb[0].mxu0
        %v1843 = vadd.f32 %v1747, %v1842
        %v1844 = vpop.f32.mrb[0].mxu0
        %1845 = vmatprep.mubr.bf16.mxu0 0
        %1846 = vmatmul.mubr.bf16.gmra.mrb[0].mxu0 %v1712
        %v1847 = vpop.f32.mrb[0].mxu0
        %v1848 = vadd.f32 %v1747, %v1847
        %v1849 = vpop.f32.mrb[0].mxu0
        %v1850 = vpop.f32.mrb[0].mxu0
        %v1851 = vadd.f32 %v1747, %v1850
        %v1852 = vpop.f32.mrb[0].mxu0
        %1853 = vmatprep.mubr.bf16.mxu0 0
        %1854 = vmatmul.mubr.bf16.gmra.mrb[0].mxu0 %v1713
        %v1855 = vpop.f32.mrb[0].mxu0
        %v1856 = vadd.f32 %v1747, %v1855
        %v1857 = vpop.f32.mrb[0].mxu0
        %v1858 = vpop.f32.mrb[0].mxu0
        %v1859 = vadd.f32 %v1747, %v1858
        %v1860 = vpop.f32.mrb[0].mxu0
        %1861 = vmatprep.mubr.bf16.mxu0 0
        %1862 = vmatmul.mubr.bf16.gmra.mrb[0].mxu0 %v1714
        %v1863 = vpop.f32.mrb[0].mxu0
        %v1864 = vadd.f32 %v1747, %v1863
        %v1865 = vpop.f32.mrb[0].mxu0
        %v1866 = vpop.f32.mrb[0].mxu0
        %v1867 = vadd.f32 %v1747, %v1866
        %v1868 = vpop.f32.mrb[0].mxu0
        %1869 = vmatprep.mubr.bf16.mxu0 0
        %1870 = vmatmul.mubr.bf16.gmra.mrb[0].mxu0 %v1715
        %v1871 = vpop.f32.mrb[0].mxu0
        %v1872 = vadd.f32 %v1747, %v1871
        %v1873 = vpop.f32.mrb[0].mxu0
        %v1874 = vpop.f32.mrb[0].mxu0
        %v1875 = vadd.f32 %v1747, %v1874
        %v1876 = vpop.f32.mrb[0].mxu0
        %1877 = vmatprep.mubr.bf16.mxu0 0
        %1878 = vmatmul.mubr.bf16.gmra.mrb[0].mxu0 %v1716
        %v1879 = vpop.f32.mrb[0].mxu0
        %v1880 = vadd.f32 %v1747, %v1879
        %v1881 = vpop.f32.mrb[0].mxu0
        %v1882 = vpop.f32.mrb[0].mxu0
        %v1883 = vadd.f32 %v1747, %v1882
        %v1884 = vpop.f32.mrb[0].mxu0
        %1885 = vmatprep.mubr.bf16.mxu0 0
        %1886 = vmatmul.mubr.bf16.gmra.mrb[0].mxu0 %v1717
        %v1887 = vpop.f32.mrb[0].mxu0
        %v1888 = vadd.f32 %v1747, %v1887
        %v1889 = vpop.f32.mrb[0].mxu0
        %v1890 = vpop.f32.mrb[0].mxu0
        %v1891 = vadd.f32 %v1747, %v1890
        %v1892 = vpop.f32.mrb[0].mxu0
        %1893 = vmatprep.mubr.bf16.mxu0 0
        %1894 = vmatmul.mubr.bf16.gmra.mrb[0].mxu0 %v1718
        %v1895 = vpop.f32.mrb[0].mxu0
        %v1896 = vadd.f32 %v1747, %v1895
        %v1897 = vpop.f32.mrb[0].mxu0
        %v1898 = vpop.f32.mrb[0].mxu0
        %v1899 = vadd.f32 %v1747, %v1898
        %v1900 = vpop.f32.mrb[0].mxu0
        %1901 = vmatprep.mubr.bf16.mxu0 0
        %1902 = vmatmul.mubr.bf16.gmra.mrb[0].mxu0 %v1719
        %v1903 = vpop.f32.mrb[0].mxu0
        %v1904 = vadd.f32 %v1747, %v1903
        %v1905 = vpop.f32.mrb[0].mxu0
        %v1906 = vpop.f32.mrb[0].mxu0
        %v1907 = vadd.f32 %v1747, %v1906
        %v1908 = vpop.f32.mrb[0].mxu0
        %1909 = vmatprep.mubr.bf16.mxu0 0
        %1910 = vmatmul.mubr.bf16.gmra.mrb[0].mxu0 %v1720
        %v1911 = vpop.f32.mrb[0].mxu0
        %v1912 = vadd.f32 %v1747, %v1911
        %v1913 = vpop.f32.mrb[0].mxu0
        %v1914 = vpop.f32.mrb[0].mxu0
        %v1915 = vadd.f32 %v1747, %v1914
        %v1916 = vpop.f32.mrb[0].mxu0
        %1917 = vmatprep.mubr.bf16.mxu0 0
        %1918 = vmatmul.mubr.bf16.gmra.mrb[0].mxu0 %v1721
        %v1919 = vpop.f32.mrb[0].mxu0
        %v1920 = vadd.f32 %v1747, %v1919
        %v1921 = vpop.f32.mrb[0].mxu0
        %v1922 = vpop.f32.mrb[0].mxu0
        %v1923 = vadd.f32 %v1747, %v1922
        %v1924 = vpop.f32.mrb[0].mxu0
        %1925 = vmatprep.mubr.bf16.mxu0 0
        %1926 = vmatmul.mubr.bf16.gmra.mrb[0].mxu0 %v1722
        %v1927 = vpop.f32.mrb[0].mxu0
        %v1928 = vadd.f32 %v1747, %v1927
        %v1929 = vpop.f32.mrb[0].mxu0
        %v1930 = vpop.f32.mrb[0].mxu0
        %v1931 = vadd.f32 %v1747, %v1930
        %v1932 = vpop.f32.mrb[0].mxu0
        %1933 = vmatprep.mubr.bf16.mxu0 0
        %1934 = vmatmul.mubr.bf16.gmra.mrb[0].mxu0 %v1723
        %v1935 = vpop.f32.mrb[0].mxu0
        %v1936 = vadd.f32 %v1747, %v1935
        %v1937 = vpop.f32.mrb[0].mxu0
        %v1938 = vpop.f32.mrb[0].mxu0
        %v1939 = vadd.f32 %v1747, %v1938
        %v1940 = vpop.f32.mrb[0].mxu0
        %1941 = vmatprep.mubr.bf16.mxu0 0
        %1942 = vmatmul.mubr.bf16.gmra.mrb[0].mxu0 %v1724
        %v1943 = vpop.f32.mrb[0].mxu0
        %v1944 = vadd.f32 %v1747, %v1943
        %v1945 = vpop.f32.mrb[0].mxu0
        %v1946 = vpop.f32.mrb[0].mxu0
        %v1947 = vadd.f32 %v1747, %v1946
        %v1948 = vpop.f32.mrb[0].mxu0
        %1949 = vmatprep.mubr.bf16.mxu0 0
        %1950 = vmatmul.mubr.bf16.gmra.mrb[0].mxu0 %v1725
        %v1951 = vpop.f32.mrb[0].mxu0
        %v1952 = vadd.f32 %v1747, %v1951
        %v1953 = vpop.f32.mrb[0].mxu0
        %v1954 = vpop.f32.mrb[0].mxu0
        %v1955 = vadd.f32 %v1747, %v1954
        %v1956 = vpop.f32.mrb[0].mxu0
        %1957 = vdwg.mxu0
        %v1958 = vmax.f32 %v1832, 0.0
        %v1959 = vmax.f32 %v1835, 0.0
        %v1960 = vmax.f32 %v1840, 0.0
        %v1961 = vmax.f32 %v1843, 0.0
        %v1962 = vmax.f32 %v1848, 0.0
        %v1963 = vmax.f32 %v1851, 0.0
        %v1964 = vmax.f32 %v1856, 0.0
        %v1965 = vmax.f32 %v1859, 0.0
        %v1966 = vmax.f32 %v1864, 0.0
        %v1967 = vmax.f32 %v1867, 0.0
        %v1968 = vmax.f32 %v1872, 0.0
        %v1969 = vmax.f32 %v1875, 0.0
        %v1970 = vmax.f32 %v1880, 0.0
        %v1971 = vmax.f32 %v1883, 0.0
        %v1972 = vmax.f32 %v1888, 0.0
        %v1973 = vmax.f32 %v1891, 0.0
        %v1974 = vmax.f32 %v1896, 0.0
        %v1975 = vmax.f32 %v1899, 0.0
        %v1976 = vmax.f32 %v1904, 0.0
        %v1977 = vmax.f32 %v1907, 0.0
        %v1978 = vmax.f32 %v1912, 0.0
        %v1979 = vmax.f32 %v1915, 0.0
        %v1980 = vmax.f32 %v1920, 0.0
        %v1981 = vmax.f32 %v1923, 0.0
        %v1982 = vmax.f32 %v1928, 0.0
        %v1983 = vmax.f32 %v1931, 0.0
        %v1984 = vmax.f32 %v1936, 0.0
        %v1985 = vmax.f32 %v1939, 0.0
        %v1986 = vmax.f32 %v1944, 0.0
        %v1987 = vmax.f32 %v1947, 0.0
        %v1988 = vmax.f32 %v1952, 0.0
        %v1989 = vmax.f32 %v1955, 0.0
        %v1990 = vpack.c.bf16 %v1959, %v1958
        %v1991 = vpack.c.bf16 %v1961, %v1960
        %v1992 = vpack.c.bf16 %v1963, %v1962
        %v1993 = vpack.c.bf16 %v1965, %v1964
        %v1994 = vpack.c.bf16 %v1967, %v1966
        %v1995 = vpack.c.bf16 %v1969, %v1968
        %v1996 = vpack.c.bf16 %v1971, %v1970
        %v1997 = vpack.c.bf16 %v1973, %v1972
        %v1998 = vpack.c.bf16 %v1975, %v1974
        %v1999 = vpack.c.bf16 %v1977, %v1976
        %v2000 = vpack.c.bf16 %v1979, %v1978
        %v2001 = vpack.c.bf16 %v1981, %v1980
        %v2002 = vpack.c.bf16 %v1983, %v1982
        %v2003 = vpack.c.bf16 %v1985, %v1984
        %v2004 = vpack.c.bf16 %v1987, %v1986
        %v2005 = vpack.c.bf16 %v1989, %v1988
        %v2006 = vld [vmem:[%s11] sm:$0xff]
        %v2007 = vld [vmem:[%s11 + $0x8] sm:$0xff]
        %v2008 = vld [vmem:[%s11 + $0x10] sm:$0xff]
        %v2009 = vld [vmem:[%s11 + $0x18] sm:$0xff]
        %v2010 = vld [vmem:[%s11 + $0x20] sm:$0xff]
        %v2011 = vld [vmem:[%s11 + $0x28] sm:$0xff]
        %v2012 = vld [vmem:[%s11 + $0x30] sm:$0xff]
        %v2013 = vld [vmem:[%s11 + $0x38] sm:$0xff]
        %v2014 = vld [vmem:[%s11 + $0x40] sm:$0xff]
        %v2015 = vld [vmem:[%s11 + $0x48] sm:$0xff]
        %v2016 = vld [vmem:[%s11 + $0x50] sm:$0xff]
        %v2017 = vld [vmem:[%s11 + $0x58] sm:$0xff]
        %v2018 = vld [vmem:[%s11 + $0x60] sm:$0xff]
        %v2019 = vld [vmem:[%s11 + $0x68] sm:$0xff]
        %v2020 = vld [vmem:[%s11 + $0x70] sm:$0xff]
        %v2021 = vld [vmem:[%s11 + $0x78] sm:$0xff]
        %v2022 = vld [vmem:[%s12] sm:$0x3]
        %v2024 = vlaneseq
        %v2025 = vshrl.u32 %v2024, 7
        %v2026 = vsub.s32 0, %v2025
        %v2027 = vrot.slane %v2022, %v2026
        %v2028 = vlaneseq
        %v2029 = vshrl.u32 %v2028, 7
        %v2030 = vsub.s32 1, %v2029
        %v2031 = vrot.slane %v2022, %v2030
        %v2050 = vunpack.c.l.b16 %v2006
        %v2051 = vunpack.c.h.b16 %v2006
        %v2052 = vunpack.c.l.b16 %v2007
        %v2053 = vunpack.c.h.b16 %v2007
        %v2054 = vunpack.c.l.b16 %v2008
        %v2055 = vunpack.c.h.b16 %v2008
        %v2056 = vunpack.c.l.b16 %v2009
        %v2057 = vunpack.c.h.b16 %v2009
        %v2058 = vunpack.c.l.b16 %v2010
        %v2059 = vunpack.c.h.b16 %v2010
        %v2060 = vunpack.c.l.b16 %v2011
        %v2061 = vunpack.c.h.b16 %v2011
        %v2062 = vunpack.c.l.b16 %v2012
        %v2063 = vunpack.c.h.b16 %v2012
        %v2064 = vunpack.c.l.b16 %v2013
        %v2065 = vunpack.c.h.b16 %v2013
        %v2066 = vunpack.c.l.b16 %v2014
        %v2067 = vunpack.c.h.b16 %v2014
        %v2068 = vunpack.c.l.b16 %v2015
        %v2069 = vunpack.c.h.b16 %v2015
        %v2070 = vunpack.c.l.b16 %v2016
        %v2071 = vunpack.c.h.b16 %v2016
        %v2072 = vunpack.c.l.b16 %v2017
        %v2073 = vunpack.c.h.b16 %v2017
        %v2074 = vunpack.c.l.b16 %v2018
        %v2075 = vunpack.c.h.b16 %v2018
        %v2076 = vunpack.c.l.b16 %v2019
        %v2077 = vunpack.c.h.b16 %v2019
        %v2078 = vunpack.c.l.b16 %v2020
        %v2079 = vunpack.c.h.b16 %v2020
        %v2080 = vunpack.c.l.b16 %v2021
        %v2081 = vunpack.c.h.b16 %v2021
        %v2082 = vpack.c.b16 %v2052, %v2050
        %v2083 = vpack.c.b16 %v2053, %v2051
        %v2084 = vpack.c.b16 %v2056, %v2054
        %v2085 = vpack.c.b16 %v2057, %v2055
        %v2086 = vpack.c.b16 %v2060, %v2058
        %v2087 = vpack.c.b16 %v2061, %v2059
        %v2088 = vpack.c.b16 %v2064, %v2062
        %v2089 = vpack.c.b16 %v2065, %v2063
        %v2090 = vpack.c.b16 %v2068, %v2066
        %v2091 = vpack.c.b16 %v2069, %v2067
        %v2092 = vpack.c.b16 %v2072, %v2070
        %v2093 = vpack.c.b16 %v2073, %v2071
        %v2094 = vpack.c.b16 %v2076, %v2074
        %v2095 = vpack.c.b16 %v2077, %v2075
        %v2096 = vpack.c.b16 %v2080, %v2078
        %v2097 = vpack.c.b16 %v2081, %v2079
        %2114 = vmatprep.subr.bf16.mxu0 %v2083
        %2115 = vmatpush1.bf16.msra.mxu0 %v2082
        %2116 = vmatprep.subr.bf16.mxu0 %v2085
        %2117 = vmatpush1.bf16.msra.mxu0 %v2084
        %2118 = vmatprep.subr.bf16.mxu0 %v2087
        %2119 = vmatpush1.bf16.msra.mxu0 %v2086
        %2120 = vmatprep.subr.bf16.mxu0 %v2089
        %2121 = vmatpush1.bf16.msra.mxu0 %v2088
        %2122 = vmatprep.subr.bf16.mxu0 %v2091
        %2123 = vmatpush1.bf16.msra.mxu0 %v2090
        %2124 = vmatprep.subr.bf16.mxu0 %v2093
        %2125 = vmatpush1.bf16.msra.mxu0 %v2092
        %2126 = vmatprep.subr.bf16.mxu0 %v2095
        %2127 = vmatpush1.bf16.msra.mxu0 %v2094
        %2128 = vmatprep.subr.bf16.mxu0 %v2097
        %2129 = vmatpush1.bf16.msra.mxu0 %v2096
        %2130 = vmatprep.subr.bf16.mxu0 0
        %2131 = vmatpush1.bf16.msra.mxu0 0
        %2132 = vmatprep.subr.bf16.mxu0 0
        %2133 = vmatpush1.bf16.msra.mxu0 0
        %2134 = vmatprep.subr.bf16.mxu0 0
        %2135 = vmatpush1.bf16.msra.mxu0 0
        %2136 = vmatprep.subr.bf16.mxu0 0
        %2137 = vmatpush1.bf16.msra.mxu0 0
        %2138 = vmatprep.subr.bf16.mxu0 0
        %2139 = vmatpush1.bf16.msra.mxu0 0
        %2140 = vmatprep.subr.bf16.mxu0 0
        %2141 = vmatpush1.bf16.msra.mxu0 0
        %2142 = vmatprep.subr.bf16.mxu0 0
        %2143 = vmatpush1.bf16.msra.mxu0 0
        %2144 = vmatprep.subr.bf16.mxu0 0
        %2145 = vmatpush1.bf16.msra.mxu0 0
        %2146 = vmatprep.mubr.bf16.mxu0 0
        %2147 = vmatmul.mubr.bf16.gmra.mrb[0].mxu0 %v1990
        %v2148 = vpop.f32.mrb[0].mxu0
        %v2149 = vadd.f32 %v2027, %v2148
        %v2150 = vpop.f32.mrb[0].mxu0
        %v2151 = vadd.f32 %v2031, %v2150
        %v2152 = vpop.f32.mrb[0].mxu0
        %v2153 = vadd.f32 %v2027, %v2152
        %v2154 = vpop.f32.mrb[0].mxu0
        %v2155 = vadd.f32 %v2031, %v2154
        %2156 = vmatprep.mubr.bf16.mxu0 0
        %2157 = vmatmul.mubr.bf16.gmra.mrb[0].mxu0 %v1991
        %v2158 = vpop.f32.mrb[0].mxu0
        %v2159 = vadd.f32 %v2027, %v2158
        %v2160 = vpop.f32.mrb[0].mxu0
        %v2161 = vadd.f32 %v2031, %v2160
        %v2162 = vpop.f32.mrb[0].mxu0
        %v2163 = vadd.f32 %v2027, %v2162
        %v2164 = vpop.f32.mrb[0].mxu0
        %v2165 = vadd.f32 %v2031, %v2164
        %2166 = vmatprep.mubr.bf16.mxu0 0
        %2167 = vmatmul.mubr.bf16.gmra.mrb[0].mxu0 %v1992
        %v2168 = vpop.f32.mrb[0].mxu0
        %v2169 = vadd.f32 %v2027, %v2168
        %v2170 = vpop.f32.mrb[0].mxu0
        %v2171 = vadd.f32 %v2031, %v2170
        %v2172 = vpop.f32.mrb[0].mxu0
        %v2173 = vadd.f32 %v2027, %v2172
        %v2174 = vpop.f32.mrb[0].mxu0
        %v2175 = vadd.f32 %v2031, %v2174
        %2176 = vmatprep.mubr.bf16.mxu0 0
        %2177 = vmatmul.mubr.bf16.gmra.mrb[0].mxu0 %v1993
        %v2178 = vpop.f32.mrb[0].mxu0
        %v2179 = vadd.f32 %v2027, %v2178
        %v2180 = vpop.f32.mrb[0].mxu0
        %v2181 = vadd.f32 %v2031, %v2180
        %v2182 = vpop.f32.mrb[0].mxu0
        %v2183 = vadd.f32 %v2027, %v2182
        %v2184 = vpop.f32.mrb[0].mxu0
        %v2185 = vadd.f32 %v2031, %v2184
        %2186 = vmatprep.mubr.bf16.mxu0 0
        %2187 = vmatmul.mubr.bf16.gmra.mrb[0].mxu0 %v1994
        %v2188 = vpop.f32.mrb[0].mxu0
        %v2189 = vadd.f32 %v2027, %v2188
        %v2190 = vpop.f32.mrb[0].mxu0
        %v2191 = vadd.f32 %v2031, %v2190
        %v2192 = vpop.f32.mrb[0].mxu0
        %v2193 = vadd.f32 %v2027, %v2192
        %v2194 = vpop.f32.mrb[0].mxu0
        %v2195 = vadd.f32 %v2031, %v2194
        %2196 = vmatprep.mubr.bf16.mxu0 0
        %2197 = vmatmul.mubr.bf16.gmra.mrb[0].mxu0 %v1995
        %v2198 = vpop.f32.mrb[0].mxu0
        %v2199 = vadd.f32 %v2027, %v2198
        %v2200 = vpop.f32.mrb[0].mxu0
        %v2201 = vadd.f32 %v2031, %v2200
        %v2202 = vpop.f32.mrb[0].mxu0
        %v2203 = vadd.f32 %v2027, %v2202
        %v2204 = vpop.f32.mrb[0].mxu0
        %v2205 = vadd.f32 %v2031, %v2204
        %2206 = vmatprep.mubr.bf16.mxu0 0
        %2207 = vmatmul.mubr.bf16.gmra.mrb[0].mxu0 %v1996
        %v2208 = vpop.f32.mrb[0].mxu0
        %v2209 = vadd.f32 %v2027, %v2208
        %v2210 = vpop.f32.mrb[0].mxu0
        %v2211 = vadd.f32 %v2031, %v2210
        %v2212 = vpop.f32.mrb[0].mxu0
        %v2213 = vadd.f32 %v2027, %v2212
        %v2214 = vpop.f32.mrb[0].mxu0
        %v2215 = vadd.f32 %v2031, %v2214
        %2216 = vmatprep.mubr.bf16.mxu0 0
        %2217 = vmatmul.mubr.bf16.gmra.mrb[0].mxu0 %v1997
        %v2218 = vpop.f32.mrb[0].mxu0
        %v2219 = vadd.f32 %v2027, %v2218
        %v2220 = vpop.f32.mrb[0].mxu0
        %v2221 = vadd.f32 %v2031, %v2220
        %v2222 = vpop.f32.mrb[0].mxu0
        %v2223 = vadd.f32 %v2027, %v2222
        %v2224 = vpop.f32.mrb[0].mxu0
        %v2225 = vadd.f32 %v2031, %v2224
        %2226 = vmatprep.mubr.bf16.mxu0 0
        %2227 = vmatmul.mubr.bf16.gmra.mrb[0].mxu0 %v1998
        %v2228 = vpop.f32.mrb[0].mxu0
        %v2229 = vadd.f32 %v2027, %v2228
        %v2230 = vpop.f32.mrb[0].mxu0
        %v2231 = vadd.f32 %v2031, %v2230
        %v2232 = vpop.f32.mrb[0].mxu0
        %v2233 = vadd.f32 %v2027, %v2232
        %v2234 = vpop.f32.mrb[0].mxu0
        %v2235 = vadd.f32 %v2031, %v2234
        %2236 = vmatprep.mubr.bf16.mxu0 0
        %2237 = vmatmul.mubr.bf16.gmra.mrb[0].mxu0 %v1999
        %v2238 = vpop.f32.mrb[0].mxu0
        %v2239 = vadd.f32 %v2027, %v2238
        %v2240 = vpop.f32.mrb[0].mxu0
        %v2241 = vadd.f32 %v2031, %v2240
        %v2242 = vpop.f32.mrb[0].mxu0
        %v2243 = vadd.f32 %v2027, %v2242
        %v2244 = vpop.f32.mrb[0].mxu0
        %v2245 = vadd.f32 %v2031, %v2244
        %2246 = vmatprep.mubr.bf16.mxu0 0
        %2247 = vmatmul.mubr.bf16.gmra.mrb[0].mxu0 %v2000
        %v2248 = vpop.f32.mrb[0].mxu0
        %v2249 = vadd.f32 %v2027, %v2248
        %v2250 = vpop.f32.mrb[0].mxu0
        %v2251 = vadd.f32 %v2031, %v2250
        %v2252 = vpop.f32.mrb[0].mxu0
        %v2253 = vadd.f32 %v2027, %v2252
        %v2254 = vpop.f32.mrb[0].mxu0
        %v2255 = vadd.f32 %v2031, %v2254
        %2256 = vmatprep.mubr.bf16.mxu0 0
        %2257 = vmatmul.mubr.bf16.gmra.mrb[0].mxu0 %v2001
        %v2258 = vpop.f32.mrb[0].mxu0
        %v2259 = vadd.f32 %v2027, %v2258
        %v2260 = vpop.f32.mrb[0].mxu0
        %v2261 = vadd.f32 %v2031, %v2260
        %v2262 = vpop.f32.mrb[0].mxu0
        %v2263 = vadd.f32 %v2027, %v2262
        %v2264 = vpop.f32.mrb[0].mxu0
        %v2265 = vadd.f32 %v2031, %v2264
        %2266 = vmatprep.mubr.bf16.mxu0 0
        %2267 = vmatmul.mubr.bf16.gmra.mrb[0].mxu0 %v2002
        %v2268 = vpop.f32.mrb[0].mxu0
        %v2269 = vadd.f32 %v2027, %v2268
        %v2270 = vpop.f32.mrb[0].mxu0
        %v2271 = vadd.f32 %v2031, %v2270
        %v2272 = vpop.f32.mrb[0].mxu0
        %v2273 = vadd.f32 %v2027, %v2272
        %v2274 = vpop.f32.mrb[0].mxu0
        %v2275 = vadd.f32 %v2031, %v2274
        %2276 = vmatprep.mubr.bf16.mxu0 0
        %2277 = vmatmul.mubr.bf16.gmra.mrb[0].mxu0 %v2003
        %v2278 = vpop.f32.mrb[0].mxu0
        %v2279 = vadd.f32 %v2027, %v2278
        %v2280 = vpop.f32.mrb[0].mxu0
        %v2281 = vadd.f32 %v2031, %v2280
        %v2282 = vpop.f32.mrb[0].mxu0
        %v2283 = vadd.f32 %v2027, %v2282
        %v2284 = vpop.f32.mrb[0].mxu0
        %v2285 = vadd.f32 %v2031, %v2284
        %2286 = vmatprep.mubr.bf16.mxu0 0
        %2287 = vmatmul.mubr.bf16.gmra.mrb[0].mxu0 %v2004
        %v2288 = vpop.f32.mrb[0].mxu0
        %v2289 = vadd.f32 %v2027, %v2288
        %v2290 = vpop.f32.mrb[0].mxu0
        %v2291 = vadd.f32 %v2031, %v2290
        %v2292 = vpop.f32.mrb[0].mxu0
        %v2293 = vadd.f32 %v2027, %v2292
        %v2294 = vpop.f32.mrb[0].mxu0
        %v2295 = vadd.f32 %v2031, %v2294
        %2296 = vmatprep.mubr.bf16.mxu0 0
        %2297 = vmatmul.mubr.bf16.gmra.mrb[0].mxu0 %v2005
        %v2298 = vpop.f32.mrb[0].mxu0
        %v2299 = vadd.f32 %v2027, %v2298
        %v2300 = vpop.f32.mrb[0].mxu0
        %v2301 = vadd.f32 %v2031, %v2300
        %v2302 = vpop.f32.mrb[0].mxu0
        %v2303 = vadd.f32 %v2027, %v2302
        %v2304 = vpop.f32.mrb[0].mxu0
        %v2305 = vadd.f32 %v2031, %v2304
        %2306 = vdwg.mxu0
        %2307 = vst [vmem:[%s436] sm:$0xff] %v2149
        %2308 = vst [vmem:[%s436 + $0x8] sm:$0xff] %v2151
        %2309 = vst [vmem:[%s436 + $0x10] sm:$0xff] %v2153
        %2310 = vst [vmem:[%s436 + $0x18] sm:$0xff] %v2155
        %2311 = vst [vmem:[%s436 + $0x20] sm:$0xff] %v2159
        %2312 = vst [vmem:[%s436 + $0x28] sm:$0xff] %v2161
        %2313 = vst [vmem:[%s436 + $0x30] sm:$0xff] %v2163
        %2314 = vst [vmem:[%s436 + $0x38] sm:$0xff] %v2165
        %2315 = vst [vmem:[%s436 + $0x40] sm:$0xff] %v2169
        %2316 = vst [vmem:[%s436 + $0x48] sm:$0xff] %v2171
        %2317 = vst [vmem:[%s436 + $0x50] sm:$0xff] %v2173
        %2318 = vst [vmem:[%s436 + $0x58] sm:$0xff] %v2175
        %2319 = vst [vmem:[%s436 + $0x60] sm:$0xff] %v2179
        %2320 = vst [vmem:[%s436 + $0x68] sm:$0xff] %v2181
        %2321 = vst [vmem:[%s436 + $0x70] sm:$0xff] %v2183
        %2322 = vst [vmem:[%s436 + $0x78] sm:$0xff] %v2185
        %2323 = vst [vmem:[%s436 + $0x80] sm:$0xff] %v2189
        %2324 = vst [vmem:[%s436 + $0x88] sm:$0xff] %v2191
        %2325 = vst [vmem:[%s436 + $0x90] sm:$0xff] %v2193
        %2326 = vst [vmem:[%s436 + $0x98] sm:$0xff] %v2195
        %2327 = vst [vmem:[%s436 + $0xa0] sm:$0xff] %v2199
        %2328 = vst [vmem:[%s436 + $0xa8] sm:$0xff] %v2201
        %2329 = vst [vmem:[%s436 + $0xb0] sm:$0xff] %v2203
        %2330 = vst [vmem:[%s436 + $0xb8] sm:$0xff] %v2205
        %2331 = vst [vmem:[%s436 + $0xc0] sm:$0xff] %v2209
        %2332 = vst [vmem:[%s436 + $0xc8] sm:$0xff] %v2211
        %2333 = vst [vmem:[%s436 + $0xd0] sm:$0xff] %v2213
        %2334 = vst [vmem:[%s436 + $0xd8] sm:$0xff] %v2215
        %2335 = vst [vmem:[%s436 + $0xe0] sm:$0xff] %v2219
        %2336 = vst [vmem:[%s436 + $0xe8] sm:$0xff] %v2221
        %2337 = vst [vmem:[%s436 + $0xf0] sm:$0xff] %v2223
        %2338 = vst [vmem:[%s436 + $0xf8] sm:$0xff] %v2225
        %2339 = vst [vmem:[%s436 + $0x100] sm:$0xff] %v2229
        %2340 = vst [vmem:[%s436 + $0x108] sm:$0xff] %v2231
        %2341 = vst [vmem:[%s436 + $0x110] sm:$0xff] %v2233
        %2342 = vst [vmem:[%s436 + $0x118] sm:$0xff] %v2235
        %2343 = vst [vmem:[%s436 + $0x120] sm:$0xff] %v2239
        %2344 = vst [vmem:[%s436 + $0x128] sm:$0xff] %v2241
        %2345 = vst [vmem:[%s436 + $0x130] sm:$0xff] %v2243
        %2346 = vst [vmem:[%s436 + $0x138] sm:$0xff] %v2245
        %2347 = vst [vmem:[%s436 + $0x140] sm:$0xff] %v2249
        %2348 = vst [vmem:[%s436 + $0x148] sm:$0xff] %v2251
        %2349 = vst [vmem:[%s436 + $0x150] sm:$0xff] %v2253
        %2350 = vst [vmem:[%s436 + $0x158] sm:$0xff] %v2255
        %2351 = vst [vmem:[%s436 + $0x160] sm:$0xff] %v2259
        %2352 = vst [vmem:[%s436 + $0x168] sm:$0xff] %v2261
        %2353 = vst [vmem:[%s436 + $0x170] sm:$0xff] %v2263
        %2354 = vst [vmem:[%s436 + $0x178] sm:$0xff] %v2265
        %2355 = vst [vmem:[%s436 + $0x180] sm:$0xff] %v2269
        %2356 = vst [vmem:[%s436 + $0x188] sm:$0xff] %v2271
        %2357 = vst [vmem:[%s436 + $0x190] sm:$0xff] %v2273
        %2358 = vst [vmem:[%s436 + $0x198] sm:$0xff] %v2275
        %2359 = vst [vmem:[%s436 + $0x1a0] sm:$0xff] %v2279
        %2360 = vst [vmem:[%s436 + $0x1a8] sm:$0xff] %v2281
        %2361 = vst [vmem:[%s436 + $0x1b0] sm:$0xff] %v2283
        %2362 = vst [vmem:[%s436 + $0x1b8] sm:$0xff] %v2285
        %2363 = vst [vmem:[%s436 + $0x1c0] sm:$0xff] %v2289
        %2364 = vst [vmem:[%s436 + $0x1c8] sm:$0xff] %v2291
        %2365 = vst [vmem:[%s436 + $0x1d0] sm:$0xff] %v2293
        %2366 = vst [vmem:[%s436 + $0x1d8] sm:$0xff] %v2295
        %2367 = vst [vmem:[%s436 + $0x1e0] sm:$0xff] %v2299
        %2368 = vst [vmem:[%s436 + $0x1e8] sm:$0xff] %v2301
        %2369 = vst [vmem:[%s436 + $0x1f0] sm:$0xff] %v2303
        %2370 = vst [vmem:[%s436 + $0x1f8] sm:$0xff] %v2305
        %s2371 = sand.u32 %s313, 1
        %s2372 = scalar_lea.sflag [#allocation3], %s2371
        %s2373 = sand.u32 %s313, 1
        %s2374 = smul.addr %s2373, 512
        %s2375 = scalar_lea.vmem [#allocation2], %s2374
        // Predicated region
        $region73: #{autoencoder_forward.1} parent=71 // pred_check
          %p2376 = pneg %p323
        $region74: #{autoencoder_forward.1} parent=71 // pred_check_branch
          %2378 = sbr.rel (%p2376) target = $region76
        $region75: #{autoencoder_forward.1} parent=71 // pred_region
          %s2379 = smul.u32 32, %s27
          %s2381 = ssub.s32 8192, 8192
          %2382 = vsyncadd %s2372, %s2381
          %s2383 = smul.addr %s2379, 2
          %s2384 = smul.addr %s2383, 128
          %s2385 = scalar_lea.hbm %s13, %s2384
          %s2386 = sshll.u32 %s2375, 4
          %s2387 = int_to_ptr.vmem [resolvable:$true] %s2386
          %2392 = dma.vmem_to_hbm [thread:$0]  %s2387, 8192, %s2385, %s2372, 256, 256, 16
        $region76: #{autoencoder_forward.1} parent=71 // pred_fallthru
          _
      $region72: #{autoencoder_forward.1} parent=5 // pred_fallthru
        _
      %p2393 = scmp.le.s32.totalorder 2, %s22
      // Predicated region
      $region77: #{autoencoder_forward.1} parent=5 // pred_check
        %p2394 = pneg %p2393
      $region78: #{autoencoder_forward.1} parent=5 // pred_check_branch
        %2396 = sbr.rel (%p2394) target = $region80
      $region79: #{autoencoder_forward.1} parent=5 // pred_region
        %s2397 = ssub.s32 %s22, 2
        // Predicated region
        $region81: #{autoencoder_forward.1} parent=79 // pred_check
          %p2398 = pneg %p329
        $region82: #{autoencoder_forward.1} parent=79 // pred_check_branch
          %2400 = sbr.rel (%p2398) target = $region84
        $region83: #{autoencoder_forward.1} parent=79 // pred_region
          %s2401 = sand.u32 %s314, 1
          %s2402 = scalar_lea.sflag [#allocation3], %s2401
          %s2403 = sand.u32 %s314, 1
          %s2404 = smul.addr %s2403, 512
          %s2405 = scalar_lea.vmem [#allocation2], %s2404
          %2406 = dma.done %s2402, 8192
        $region84: #{autoencoder_forward.1} parent=79 // pred_fallthru
          _
      $region80: #{autoencoder_forward.1} parent=5 // pred_fallthru
        _
    $region6: #{autoencoder_forward.1} parent=1 // loop_footer
      %s26 = sadd.s32 1, %s22
    $region7: #{autoencoder_forward.1} parent=1 // loop_footer_branch
      %21 = sbr.rel target = $region3
    $region8: #{autoencoder_forward.1} parent=1 // loop_exit
      _
    %2407 = vsyncpa [#allocation3], 1
    %s2408 = scalar_lea.sflag [#allocation3], 1
    %2409 = vsyncpa %s2408, 1

</llo_original>
